<compile_context>
chip_gen: v7x
topology: tpu7x:2x2x1
jax: 0.10.0
libtpu: 0.0.40
codegen_flags: <defaults>
</compile_context>

<pallas_src>
import functools

import jax
import jax.numpy as jnp
import numpy as np
from jax.experimental import pallas as pl
from jax.experimental.pallas import tpu as pltpu


def _vmem_spec():
    # Shapes are tiny: every array lives whole in VMEM (block == full array).
    return pl.BlockSpec(memory_space=pltpu.MemorySpace.VMEM)


# ---------------------------------------------------------------------------
# Single fused kernel: MLP -> exp(logits/tau) -> Sinkhorn-Knopp iterations.
# ---------------------------------------------------------------------------
def fused_sinkhorn_kernel(x_ref, w0, b0, w1, b1, w2, b2, w3r, b3r,
                          rm_ref, cm_ref, out_ref, logits_s,
                          *, tau, num_iterations, n_rows, n_cols):
    f32 = jnp.float32

    # ---- MLP: 3 hidden ReLU layers + final linear ------------------------
    h = x_ref[...]                                                    # (1, 2*ndim)
    h = jnp.maximum(
        jnp.dot(h, w0[...], preferred_element_type=f32) + b0[...], 0.0)
    h = jnp.maximum(
        jnp.dot(h, w1[...], preferred_element_type=f32) + b1[...], 0.0)
    h = jnp.maximum(
        jnp.dot(h, w2[...], preferred_element_type=f32) + b2[...], 0.0)

    # Final layer: w3r is host-reshaped to (n_rows, K, n_cols) so each plan row
    # is produced directly in its (row, col) position -> no flat reshape needed.
    for i in range(n_rows):                       # static Python loop, unrolled
        row = jnp.dot(h, w3r[i], preferred_element_type=f32)         # (1, n_cols)
        logits_s[pl.ds(i, 1), :] = row
    logits = logits_s[...] + b3r[...]                                 # (n, m)

    # ---- A0 = exp(logits / tau), max-stabilized ---------------------------
    # Sinkhorn normalization is invariant to a global positive scale of A0
    # (up to the 1e-12 eps), so subtracting the max only improves stability.
    logits = logits - jnp.max(logits)
    A = jnp.exp(logits * (1.0 / tau))

    # ---- Sinkhorn-Knopp sweeps, fully unrolled ----------------------------
    # Exact divides (not EUP approx reciprocal): the approx variant's ~2^-14
    # relative error compounds over 2*num_iterations normalizations and blew
    # past the correctness tolerance; at this size the divide cost is nil.
    eps = 1e-12
    rm = rm_ref[...]                               # (n, 1) row margins
    cm = cm_ref[...]                               # (1, m) col margins
    for _ in range(num_iterations):
        row_sums = jnp.sum(A, axis=1, keepdims=True)                 # (n, 1)
        A = A * (rm / (row_sums + eps))
        col_sums = jnp.sum(A, axis=0, keepdims=True)                 # (1, m)
        A = A * (cm / (col_sums + eps))

    out_ref[...] = A


# ---------------------------------------------------------------------------
# Wrapper (plain-JAX glue: parameter reshapes + the single pallas_call).
# ---------------------------------------------------------------------------
def sinkhorn_forward(params, row_margins, col_margins, *, tau, n_rows, n_cols,
                     num_iterations):
    ndim = row_margins.shape[0]
    x = jnp.concatenate([row_margins, col_margins]).reshape(1, 2 * ndim)

    w0, b0, w1, b1, w2, b2, w3, b3 = params
    k3 = w3.shape[0]
    # (K, n*m) -> (n, K, m): row-block view of the final layer's weight.
    w3r = jnp.transpose(w3.reshape(k3, n_rows, n_cols), (1, 0, 2))
    b3r = b3.reshape(n_rows, n_cols)

    kernel = functools.partial(
        fused_sinkhorn_kernel, tau=tau, num_iterations=num_iterations,
        n_rows=n_rows, n_cols=n_cols)

    return pl.pallas_call(
        kernel,
        out_shape=jax.ShapeDtypeStruct((n_rows, n_cols), jnp.float32),
        in_specs=[_vmem_spec()] * 11,
        out_specs=_vmem_spec(),
        scratch_shapes=[pltpu.VMEM((n_rows, n_cols), jnp.float32)],
    )(x, w0, b0, w1, b1, w2, b2, w3r, b3r,
      row_margins.reshape(n_rows, 1), col_margins.reshape(1, n_cols))


# ---------------------------------------------------------------------------
# Pure-JAX reference (mirrors the PyTorch module) for a correctness check.
# ---------------------------------------------------------------------------
def sinkhorn_forward_ref(params, row_margins, col_margins, *, tau, n_rows,
                         n_cols, num_iterations):
    ndim = row_margins.shape[0]
    h = jnp.concatenate([row_margins, col_margins]).reshape(1, 2 * ndim)
    for i in range(0, len(params) - 2, 2):
        h = jnp.maximum(h @ params[i] + params[i + 1], 0.0)
    logits = (h @ params[-2] + params[-1]).reshape(n_rows, n_cols)
    A = jnp.exp(logits / tau)
    eps = 1e-12
    rm = row_margins.reshape(n_rows, 1)
    cm = col_margins.reshape(1, n_cols)
    for _ in range(num_iterations):
        A = A * (rm / (A.sum(axis=1, keepdims=True) + eps))
        A = A * (cm / (A.sum(axis=0, keepdims=True) + eps))
    return A


if __name__ == "__main__":
    key = jax.random.PRNGKey(0)

    # Module hyper-parameters (small, consistent with __init__).
    ndim = 8                      # row/col margins length
    n_rows, n_cols = ndim, ndim
    output_dim = n_rows * n_cols  # MLP output reshaped to the (n, m) plan
    tau = 0.5
    hidden_layers = [64, 64, 32]
    num_iterations = 10

    # Deterministic PyTorch-style Linear init: U(-1/sqrt(fan_in), 1/sqrt(fan_in)).
    dims = [2 * ndim] + hidden_layers + [output_dim]
    params = []
    for din, dout in zip(dims[:-1], dims[1:]):
        key, kw, kb = jax.random.split(key, 3)
        bound = 1.0 / float(np.sqrt(din))
        W = jax.random.uniform(kw, (din, dout), jnp.float32, -bound, bound)
        b = jax.random.uniform(kb, (1, dout), jnp.float32, -bound, bound)
        params += [W, b]

    # Deterministic positive margins (each normalized to sum to 1).
    key, k1, k2 = jax.random.split(key, 3)
    row_margins = jax.nn.softmax(jax.random.normal(k1, (n_rows,))).astype(jnp.float32)
    col_margins = jax.nn.softmax(jax.random.normal(k2, (n_cols,))).astype(jnp.float32)

    A = sinkhorn_forward(params, row_margins, col_margins, tau=tau,
                         n_rows=n_rows, n_cols=n_cols,
                         num_iterations=num_iterations)
    A = jax.block_until_ready(A)

    A_ref = sinkhorn_forward_ref(params, row_margins, col_margins, tau=tau,
                                 n_rows=n_rows, n_cols=n_cols,
                                 num_iterations=num_iterations)
    # Exact divides in-kernel; remaining deltas are matmul-ordering / exp
    # rounding only.
    np.testing.assert_allclose(np.asarray(A), np.asarray(A_ref),
                               rtol=5e-4, atol=1e-6)

    print("KERNEL_OK")
</pallas_src>

<mosaic_0001>
module attributes {stable_mosaic.version = 11 : i64} {
  func.func @fused_sinkhorn_kernel(%arg0: memref<1x16xf32, #tpu.memory_space<vmem>>, %arg1: memref<16x64xf32, #tpu.memory_space<vmem>>, %arg2: memref<1x64xf32, #tpu.memory_space<vmem>>, %arg3: memref<64x64xf32, #tpu.memory_space<vmem>>, %arg4: memref<1x64xf32, #tpu.memory_space<vmem>>, %arg5: memref<64x32xf32, #tpu.memory_space<vmem>>, %arg6: memref<1x32xf32, #tpu.memory_space<vmem>>, %arg7: memref<8x32x8xf32, #tpu.memory_space<vmem>>, %arg8: memref<8x8xf32, #tpu.memory_space<vmem>>, %arg9: memref<8x1xf32, #tpu.memory_space<vmem>>, %arg10: memref<1x8xf32, #tpu.memory_space<vmem>>, %arg11: memref<8x8xf32, #tpu.memory_space<vmem>>, %arg12: memref<8x8xf32, #tpu.memory_space<vmem>>) attributes {dimension_semantics = [], scalar_prefetch = 0 : i64, scratch_operands = 1 : i64, tpu.core_type = #tpu.core_type<tc>} {
    %c0 = arith.constant 0 : index
    %c0_0 = arith.constant 0 : index
    %0 = vector.load %arg0[%c0, %c0_0] : memref<1x16xf32, #tpu.memory_space<vmem>>, vector<1x16xf32>
    %c0_1 = arith.constant 0 : index
    %c0_2 = arith.constant 0 : index
    %1 = vector.load %arg1[%c0_1, %c0_2] : memref<16x64xf32, #tpu.memory_space<vmem>>, vector<16x64xf32>
    %cst = arith.constant dense<0.000000e+00> : vector<1x64xf32>
    %2 = tpu.matmul %0, %1, %cst {dimension_numbers = #tpu.dot_dimension_numbers<[1], [0], [0], [1], [0, 0, 1, 1], [], []>} : vector<1x16xf32>, vector<16x64xf32>, vector<1x64xf32> -> vector<1x64xf32>
    %c0_3 = arith.constant 0 : index
    %c0_4 = arith.constant 0 : index
    %3 = vector.load %arg2[%c0_3, %c0_4] : memref<1x64xf32, #tpu.memory_space<vmem>>, vector<1x64xf32>
    %4 = arith.addf %2, %3 : vector<1x64xf32>
    %cst_5 = arith.constant 0.000000e+00 : f32
    %5 = vector.broadcast %cst_5 : f32 to vector<1x64xf32>
    %6 = arith.maximumf %4, %5 : vector<1x64xf32>
    %c0_6 = arith.constant 0 : index
    %c0_7 = arith.constant 0 : index
    %7 = vector.load %arg3[%c0_6, %c0_7] : memref<64x64xf32, #tpu.memory_space<vmem>>, vector<64x64xf32>
    %cst_8 = arith.constant dense<0.000000e+00> : vector<1x64xf32>
    %8 = tpu.matmul %6, %7, %cst_8 {dimension_numbers = #tpu.dot_dimension_numbers<[1], [0], [0], [1], [0, 0, 1, 1], [], []>} : vector<1x64xf32>, vector<64x64xf32>, vector<1x64xf32> -> vector<1x64xf32>
    %c0_9 = arith.constant 0 : index
    %c0_10 = arith.constant 0 : index
    %9 = vector.load %arg4[%c0_9, %c0_10] : memref<1x64xf32, #tpu.memory_space<vmem>>, vector<1x64xf32>
    %10 = arith.addf %8, %9 : vector<1x64xf32>
    %cst_11 = arith.constant 0.000000e+00 : f32
    %11 = vector.broadcast %cst_11 : f32 to vector<1x64xf32>
    %12 = arith.maximumf %10, %11 : vector<1x64xf32>
    %c0_12 = arith.constant 0 : index
    %c0_13 = arith.constant 0 : index
    %13 = vector.load %arg5[%c0_12, %c0_13] : memref<64x32xf32, #tpu.memory_space<vmem>>, vector<64x32xf32>
    %cst_14 = arith.constant dense<0.000000e+00> : vector<1x32xf32>
    %14 = tpu.matmul %12, %13, %cst_14 {dimension_numbers = #tpu.dot_dimension_numbers<[1], [0], [0], [1], [0, 0, 1, 1], [], []>} : vector<1x64xf32>, vector<64x32xf32>, vector<1x32xf32> -> vector<1x32xf32>
    %c0_15 = arith.constant 0 : index
    %c0_16 = arith.constant 0 : index
    %15 = vector.load %arg6[%c0_15, %c0_16] : memref<1x32xf32, #tpu.memory_space<vmem>>, vector<1x32xf32>
    %16 = arith.addf %14, %15 : vector<1x32xf32>
    %cst_17 = arith.constant 0.000000e+00 : f32
    %17 = vector.broadcast %cst_17 : f32 to vector<1x32xf32>
    %18 = arith.maximumf %16, %17 : vector<1x32xf32>
    %c0_18 = arith.constant 0 : index
    %c0_19 = arith.constant 0 : index
    %c0_20 = arith.constant 0 : index
    %19 = vector.load %arg7[%c0_18, %c0_19, %c0_20] : memref<8x32x8xf32, #tpu.memory_space<vmem>>, vector<1x32x8xf32>
    %20 = vector.shape_cast %19 : vector<1x32x8xf32> to vector<32x8xf32>
    %cst_21 = arith.constant dense<0.000000e+00> : vector<1x8xf32>
    %21 = tpu.matmul %18, %20, %cst_21 {dimension_numbers = #tpu.dot_dimension_numbers<[1], [0], [0], [1], [0, 0, 1, 1], [], []>} : vector<1x32xf32>, vector<32x8xf32>, vector<1x8xf32> -> vector<1x8xf32>
    %c0_22 = arith.constant 0 : index
    %c0_23 = arith.constant 0 : index
    %22 = vector.load %arg12[%c0_22, %c0_23] : memref<8x8xf32, #tpu.memory_space<vmem>>, vector<1x8xf32>
    tpu.vector_store %arg12[%c0_22, %c0_23], %21 {strides = array<i32>} : memref<8x8xf32, #tpu.memory_space<vmem>>, vector<1x8xf32>,
    %c1 = arith.constant 1 : index
    %c0_24 = arith.constant 0 : index
    %c0_25 = arith.constant 0 : index
    %23 = vector.load %arg7[%c1, %c0_24, %c0_25] : memref<8x32x8xf32, #tpu.memory_space<vmem>>, vector<1x32x8xf32>
    %24 = vector.shape_cast %23 : vector<1x32x8xf32> to vector<32x8xf32>
    %cst_26 = arith.constant dense<0.000000e+00> : vector<1x8xf32>
    %25 = tpu.matmul %18, %24, %cst_26 {dimension_numbers = #tpu.dot_dimension_numbers<[1], [0], [0], [1], [0, 0, 1, 1], [], []>} : vector<1x32xf32>, vector<32x8xf32>, vector<1x8xf32> -> vector<1x8xf32>
    %c1_27 = arith.constant 1 : index
    %c0_28 = arith.constant 0 : index
    %26 = vector.load %arg12[%c1_27, %c0_28] : memref<8x8xf32, #tpu.memory_space<vmem>>, vector<1x8xf32>
    tpu.vector_store %arg12[%c1_27, %c0_28], %25 {strides = array<i32>} : memref<8x8xf32, #tpu.memory_space<vmem>>, vector<1x8xf32>,
    %c2 = arith.constant 2 : index
    %c0_29 = arith.constant 0 : index
    %c0_30 = arith.constant 0 : index
    %27 = vector.load %arg7[%c2, %c0_29, %c0_30] : memref<8x32x8xf32, #tpu.memory_space<vmem>>, vector<1x32x8xf32>
    %28 = vector.shape_cast %27 : vector<1x32x8xf32> to vector<32x8xf32>
    %cst_31 = arith.constant dense<0.000000e+00> : vector<1x8xf32>
    %29 = tpu.matmul %18, %28, %cst_31 {dimension_numbers = #tpu.dot_dimension_numbers<[1], [0], [0], [1], [0, 0, 1, 1], [], []>} : vector<1x32xf32>, vector<32x8xf32>, vector<1x8xf32> -> vector<1x8xf32>
    %c2_32 = arith.constant 2 : index
    %c0_33 = arith.constant 0 : index
    %30 = vector.load %arg12[%c2_32, %c0_33] : memref<8x8xf32, #tpu.memory_space<vmem>>, vector<1x8xf32>
    tpu.vector_store %arg12[%c2_32, %c0_33], %29 {strides = array<i32>} : memref<8x8xf32, #tpu.memory_space<vmem>>, vector<1x8xf32>,
    %c3 = arith.constant 3 : index
    %c0_34 = arith.constant 0 : index
    %c0_35 = arith.constant 0 : index
    %31 = vector.load %arg7[%c3, %c0_34, %c0_35] : memref<8x32x8xf32, #tpu.memory_space<vmem>>, vector<1x32x8xf32>
    %32 = vector.shape_cast %31 : vector<1x32x8xf32> to vector<32x8xf32>
    %cst_36 = arith.constant dense<0.000000e+00> : vector<1x8xf32>
    %33 = tpu.matmul %18, %32, %cst_36 {dimension_numbers = #tpu.dot_dimension_numbers<[1], [0], [0], [1], [0, 0, 1, 1], [], []>} : vector<1x32xf32>, vector<32x8xf32>, vector<1x8xf32> -> vector<1x8xf32>
    %c3_37 = arith.constant 3 : index
    %c0_38 = arith.constant 0 : index
    %34 = vector.load %arg12[%c3_37, %c0_38] : memref<8x8xf32, #tpu.memory_space<vmem>>, vector<1x8xf32>
    tpu.vector_store %arg12[%c3_37, %c0_38], %33 {strides = array<i32>} : memref<8x8xf32, #tpu.memory_space<vmem>>, vector<1x8xf32>,
    %c4 = arith.constant 4 : index
    %c0_39 = arith.constant 0 : index
    %c0_40 = arith.constant 0 : index
    %35 = vector.load %arg7[%c4, %c0_39, %c0_40] : memref<8x32x8xf32, #tpu.memory_space<vmem>>, vector<1x32x8xf32>
    %36 = vector.shape_cast %35 : vector<1x32x8xf32> to vector<32x8xf32>
    %cst_41 = arith.constant dense<0.000000e+00> : vector<1x8xf32>
    %37 = tpu.matmul %18, %36, %cst_41 {dimension_numbers = #tpu.dot_dimension_numbers<[1], [0], [0], [1], [0, 0, 1, 1], [], []>} : vector<1x32xf32>, vector<32x8xf32>, vector<1x8xf32> -> vector<1x8xf32>
    %c4_42 = arith.constant 4 : index
    %c0_43 = arith.constant 0 : index
    %38 = vector.load %arg12[%c4_42, %c0_43] : memref<8x8xf32, #tpu.memory_space<vmem>>, vector<1x8xf32>
    tpu.vector_store %arg12[%c4_42, %c0_43], %37 {strides = array<i32>} : memref<8x8xf32, #tpu.memory_space<vmem>>, vector<1x8xf32>,
    %c5 = arith.constant 5 : index
    %c0_44 = arith.constant 0 : index
    %c0_45 = arith.constant 0 : index
    %39 = vector.load %arg7[%c5, %c0_44, %c0_45] : memref<8x32x8xf32, #tpu.memory_space<vmem>>, vector<1x32x8xf32>
    %40 = vector.shape_cast %39 : vector<1x32x8xf32> to vector<32x8xf32>
    %cst_46 = arith.constant dense<0.000000e+00> : vector<1x8xf32>
    %41 = tpu.matmul %18, %40, %cst_46 {dimension_numbers = #tpu.dot_dimension_numbers<[1], [0], [0], [1], [0, 0, 1, 1], [], []>} : vector<1x32xf32>, vector<32x8xf32>, vector<1x8xf32> -> vector<1x8xf32>
    %c5_47 = arith.constant 5 : index
    %c0_48 = arith.constant 0 : index
    %42 = vector.load %arg12[%c5_47, %c0_48] : memref<8x8xf32, #tpu.memory_space<vmem>>, vector<1x8xf32>
    tpu.vector_store %arg12[%c5_47, %c0_48], %41 {strides = array<i32>} : memref<8x8xf32, #tpu.memory_space<vmem>>, vector<1x8xf32>,
    %c6 = arith.constant 6 : index
    %c0_49 = arith.constant 0 : index
    %c0_50 = arith.constant 0 : index
    %43 = vector.load %arg7[%c6, %c0_49, %c0_50] : memref<8x32x8xf32, #tpu.memory_space<vmem>>, vector<1x32x8xf32>
    %44 = vector.shape_cast %43 : vector<1x32x8xf32> to vector<32x8xf32>
    %cst_51 = arith.constant dense<0.000000e+00> : vector<1x8xf32>
    %45 = tpu.matmul %18, %44, %cst_51 {dimension_numbers = #tpu.dot_dimension_numbers<[1], [0], [0], [1], [0, 0, 1, 1], [], []>} : vector<1x32xf32>, vector<32x8xf32>, vector<1x8xf32> -> vector<1x8xf32>
    %c6_52 = arith.constant 6 : index
    %c0_53 = arith.constant 0 : index
    %46 = vector.load %arg12[%c6_52, %c0_53] : memref<8x8xf32, #tpu.memory_space<vmem>>, vector<1x8xf32>
    tpu.vector_store %arg12[%c6_52, %c0_53], %45 {strides = array<i32>} : memref<8x8xf32, #tpu.memory_space<vmem>>, vector<1x8xf32>,
    %c7 = arith.constant 7 : index
    %c0_54 = arith.constant 0 : index
    %c0_55 = arith.constant 0 : index
    %47 = vector.load %arg7[%c7, %c0_54, %c0_55] : memref<8x32x8xf32, #tpu.memory_space<vmem>>, vector<1x32x8xf32>
    %48 = vector.shape_cast %47 : vector<1x32x8xf32> to vector<32x8xf32>
    %cst_56 = arith.constant dense<0.000000e+00> : vector<1x8xf32>
    %49 = tpu.matmul %18, %48, %cst_56 {dimension_numbers = #tpu.dot_dimension_numbers<[1], [0], [0], [1], [0, 0, 1, 1], [], []>} : vector<1x32xf32>, vector<32x8xf32>, vector<1x8xf32> -> vector<1x8xf32>
    %c7_57 = arith.constant 7 : index
    %c0_58 = arith.constant 0 : index
    %50 = vector.load %arg12[%c7_57, %c0_58] : memref<8x8xf32, #tpu.memory_space<vmem>>, vector<1x8xf32>
    tpu.vector_store %arg12[%c7_57, %c0_58], %49 {strides = array<i32>} : memref<8x8xf32, #tpu.memory_space<vmem>>, vector<1x8xf32>,
    %c0_59 = arith.constant 0 : index
    %c0_60 = arith.constant 0 : index
    %51 = vector.load %arg12[%c0_59, %c0_60] : memref<8x8xf32, #tpu.memory_space<vmem>>, vector<8x8xf32>
    %c0_61 = arith.constant 0 : index
    %c0_62 = arith.constant 0 : index
    %52 = vector.load %arg8[%c0_61, %c0_62] : memref<8x8xf32, #tpu.memory_space<vmem>>, vector<8x8xf32>
    %53 = arith.addf %51, %52 : vector<8x8xf32>
    %54 = vector.shape_cast %53 : vector<8x8xf32> to vector<1x8x8xf32>
    %cst_63 = arith.constant dense<0xFF800000> : vector<1xf32>
    %55 = vector.multi_reduction <maximumf>, %54, %cst_63 [1, 2] : vector<1x8x8xf32> to vector<1xf32>
    %56 = vector.shape_cast %55 : vector<1xf32> to vector<1x1x1xf32>
    %57 = vector.extract %56[0, 0, 0] : f32 from vector<1x1x1xf32>
    %58 = vector.broadcast %57 : f32 to vector<8x8xf32>
    %59 = arith.subf %53, %58 : vector<8x8xf32>
    %cst_64 = arith.constant 2.000000e+00 : f32
    %60 = vector.broadcast %cst_64 : f32 to vector<8x8xf32>
    %61 = arith.mulf %59, %60 : vector<8x8xf32>
    %62 = math.exp %61 : vector<8x8xf32>
    %c0_65 = arith.constant 0 : index
    %c0_66 = arith.constant 0 : index
    %63 = vector.load %arg9[%c0_65, %c0_66] : memref<8x1xf32, #tpu.memory_space<vmem>>, vector<8x1xf32>
    %c0_67 = arith.constant 0 : index
    %c0_68 = arith.constant 0 : index
    %64 = vector.load %arg10[%c0_67, %c0_68] : memref<1x8xf32, #tpu.memory_space<vmem>>, vector<1x8xf32>
    %cst_69 = arith.constant dense<0.000000e+00> : vector<8xf32>
    %65 = vector.multi_reduction <add>, %62, %cst_69 [1] : vector<8x8xf32> to vector<8xf32>
    %66 = vector.shape_cast %65 : vector<8xf32> to vector<8x1xf32>
    %cst_70 = arith.constant 9.99999996E-13 : f32
    %67 = vector.broadcast %cst_70 : f32 to vector<8x1xf32>
    %68 = arith.addf %66, %67 : vector<8x1xf32>
    %69 = arith.divf %63, %68 : vector<8x1xf32>
    %70 = vector.broadcast %69 : vector<8x1xf32> to vector<8x8xf32>
    %71 = arith.mulf %62, %70 : vector<8x8xf32>
    %cst_71 = arith.constant dense<0.000000e+00> : vector<8xf32>
    %72 = vector.multi_reduction <add>, %71, %cst_71 [0] : vector<8x8xf32> to vector<8xf32>
    %73 = vector.shape_cast %72 : vector<8xf32> to vector<1x8xf32>
    %cst_72 = arith.constant 9.99999996E-13 : f32
    %74 = vector.broadcast %cst_72 : f32 to vector<1x8xf32>
    %75 = arith.addf %73, %74 : vector<1x8xf32>
    %76 = arith.divf %64, %75 : vector<1x8xf32>
    %77 = vector.broadcast %76 : vector<1x8xf32> to vector<8x8xf32>
    %78 = arith.mulf %71, %77 : vector<8x8xf32>
    %cst_73 = arith.constant dense<0.000000e+00> : vector<8xf32>
    %79 = vector.multi_reduction <add>, %78, %cst_73 [1] : vector<8x8xf32> to vector<8xf32>
    %80 = vector.shape_cast %79 : vector<8xf32> to vector<8x1xf32>
    %cst_74 = arith.constant 9.99999996E-13 : f32
    %81 = vector.broadcast %cst_74 : f32 to vector<8x1xf32>
    %82 = arith.addf %80, %81 : vector<8x1xf32>
    %83 = arith.divf %63, %82 : vector<8x1xf32>
    %84 = vector.broadcast %83 : vector<8x1xf32> to vector<8x8xf32>
    %85 = arith.mulf %78, %84 : vector<8x8xf32>
    %cst_75 = arith.constant dense<0.000000e+00> : vector<8xf32>
    %86 = vector.multi_reduction <add>, %85, %cst_75 [0] : vector<8x8xf32> to vector<8xf32>
    %87 = vector.shape_cast %86 : vector<8xf32> to vector<1x8xf32>
    %cst_76 = arith.constant 9.99999996E-13 : f32
    %88 = vector.broadcast %cst_76 : f32 to vector<1x8xf32>
    %89 = arith.addf %87, %88 : vector<1x8xf32>
    %90 = arith.divf %64, %89 : vector<1x8xf32>
    %91 = vector.broadcast %90 : vector<1x8xf32> to vector<8x8xf32>
    %92 = arith.mulf %85, %91 : vector<8x8xf32>
    %cst_77 = arith.constant dense<0.000000e+00> : vector<8xf32>
    %93 = vector.multi_reduction <add>, %92, %cst_77 [1] : vector<8x8xf32> to vector<8xf32>
    %94 = vector.shape_cast %93 : vector<8xf32> to vector<8x1xf32>
    %cst_78 = arith.constant 9.99999996E-13 : f32
    %95 = vector.broadcast %cst_78 : f32 to vector<8x1xf32>
    %96 = arith.addf %94, %95 : vector<8x1xf32>
    %97 = arith.divf %63, %96 : vector<8x1xf32>
    %98 = vector.broadcast %97 : vector<8x1xf32> to vector<8x8xf32>
    %99 = arith.mulf %92, %98 : vector<8x8xf32>
    %cst_79 = arith.constant dense<0.000000e+00> : vector<8xf32>
    %100 = vector.multi_reduction <add>, %99, %cst_79 [0] : vector<8x8xf32> to vector<8xf32>
    %101 = vector.shape_cast %100 : vector<8xf32> to vector<1x8xf32>
    %cst_80 = arith.constant 9.99999996E-13 : f32
    %102 = vector.broadcast %cst_80 : f32 to vector<1x8xf32>
    %103 = arith.addf %101, %102 : vector<1x8xf32>
    %104 = arith.divf %64, %103 : vector<1x8xf32>
    %105 = vector.broadcast %104 : vector<1x8xf32> to vector<8x8xf32>
    %106 = arith.mulf %99, %105 : vector<8x8xf32>
    %cst_81 = arith.constant dense<0.000000e+00> : vector<8xf32>
    %107 = vector.multi_reduction <add>, %106, %cst_81 [1] : vector<8x8xf32> to vector<8xf32>
    %108 = vector.shape_cast %107 : vector<8xf32> to vector<8x1xf32>
    %cst_82 = arith.constant 9.99999996E-13 : f32
    %109 = vector.broadcast %cst_82 : f32 to vector<8x1xf32>
    %110 = arith.addf %108, %109 : vector<8x1xf32>
    %111 = arith.divf %63, %110 : vector<8x1xf32>
    %112 = vector.broadcast %111 : vector<8x1xf32> to vector<8x8xf32>
    %113 = arith.mulf %106, %112 : vector<8x8xf32>
    %cst_83 = arith.constant dense<0.000000e+00> : vector<8xf32>
    %114 = vector.multi_reduction <add>, %113, %cst_83 [0] : vector<8x8xf32> to vector<8xf32>
    %115 = vector.shape_cast %114 : vector<8xf32> to vector<1x8xf32>
    %cst_84 = arith.constant 9.99999996E-13 : f32
    %116 = vector.broadcast %cst_84 : f32 to vector<1x8xf32>
    %117 = arith.addf %115, %116 : vector<1x8xf32>
    %118 = arith.divf %64, %117 : vector<1x8xf32>
    %119 = vector.broadcast %118 : vector<1x8xf32> to vector<8x8xf32>
    %120 = arith.mulf %113, %119 : vector<8x8xf32>
    %cst_85 = arith.constant dense<0.000000e+00> : vector<8xf32>
    %121 = vector.multi_reduction <add>, %120, %cst_85 [1] : vector<8x8xf32> to vector<8xf32>
    %122 = vector.shape_cast %121 : vector<8xf32> to vector<8x1xf32>
    %cst_86 = arith.constant 9.99999996E-13 : f32
    %123 = vector.broadcast %cst_86 : f32 to vector<8x1xf32>
    %124 = arith.addf %122, %123 : vector<8x1xf32>
    %125 = arith.divf %63, %124 : vector<8x1xf32>
    %126 = vector.broadcast %125 : vector<8x1xf32> to vector<8x8xf32>
    %127 = arith.mulf %120, %126 : vector<8x8xf32>
    %cst_87 = arith.constant dense<0.000000e+00> : vector<8xf32>
    %128 = vector.multi_reduction <add>, %127, %cst_87 [0] : vector<8x8xf32> to vector<8xf32>
    %129 = vector.shape_cast %128 : vector<8xf32> to vector<1x8xf32>
    %cst_88 = arith.constant 9.99999996E-13 : f32
    %130 = vector.broadcast %cst_88 : f32 to vector<1x8xf32>
    %131 = arith.addf %129, %130 : vector<1x8xf32>
    %132 = arith.divf %64, %131 : vector<1x8xf32>
    %133 = vector.broadcast %132 : vector<1x8xf32> to vector<8x8xf32>
    %134 = arith.mulf %127, %133 : vector<8x8xf32>
    %cst_89 = arith.constant dense<0.000000e+00> : vector<8xf32>
    %135 = vector.multi_reduction <add>, %134, %cst_89 [1] : vector<8x8xf32> to vector<8xf32>
    %136 = vector.shape_cast %135 : vector<8xf32> to vector<8x1xf32>
    %cst_90 = arith.constant 9.99999996E-13 : f32
    %137 = vector.broadcast %cst_90 : f32 to vector<8x1xf32>
    %138 = arith.addf %136, %137 : vector<8x1xf32>
    %139 = arith.divf %63, %138 : vector<8x1xf32>
    %140 = vector.broadcast %139 : vector<8x1xf32> to vector<8x8xf32>
    %141 = arith.mulf %134, %140 : vector<8x8xf32>
    %cst_91 = arith.constant dense<0.000000e+00> : vector<8xf32>
    %142 = vector.multi_reduction <add>, %141, %cst_91 [0] : vector<8x8xf32> to vector<8xf32>
    %143 = vector.shape_cast %142 : vector<8xf32> to vector<1x8xf32>
    %cst_92 = arith.constant 9.99999996E-13 : f32
    %144 = vector.broadcast %cst_92 : f32 to vector<1x8xf32>
    %145 = arith.addf %143, %144 : vector<1x8xf32>
    %146 = arith.divf %64, %145 : vector<1x8xf32>
    %147 = vector.broadcast %146 : vector<1x8xf32> to vector<8x8xf32>
    %148 = arith.mulf %141, %147 : vector<8x8xf32>
    %cst_93 = arith.constant dense<0.000000e+00> : vector<8xf32>
    %149 = vector.multi_reduction <add>, %148, %cst_93 [1] : vector<8x8xf32> to vector<8xf32>
    %150 = vector.shape_cast %149 : vector<8xf32> to vector<8x1xf32>
    %cst_94 = arith.constant 9.99999996E-13 : f32
    %151 = vector.broadcast %cst_94 : f32 to vector<8x1xf32>
    %152 = arith.addf %150, %151 : vector<8x1xf32>
    %153 = arith.divf %63, %152 : vector<8x1xf32>
    %154 = vector.broadcast %153 : vector<8x1xf32> to vector<8x8xf32>
    %155 = arith.mulf %148, %154 : vector<8x8xf32>
    %cst_95 = arith.constant dense<0.000000e+00> : vector<8xf32>
    %156 = vector.multi_reduction <add>, %155, %cst_95 [0] : vector<8x8xf32> to vector<8xf32>
    %157 = vector.shape_cast %156 : vector<8xf32> to vector<1x8xf32>
    %cst_96 = arith.constant 9.99999996E-13 : f32
    %158 = vector.broadcast %cst_96 : f32 to vector<1x8xf32>
    %159 = arith.addf %157, %158 : vector<1x8xf32>
    %160 = arith.divf %64, %159 : vector<1x8xf32>
    %161 = vector.broadcast %160 : vector<1x8xf32> to vector<8x8xf32>
    %162 = arith.mulf %155, %161 : vector<8x8xf32>
    %cst_97 = arith.constant dense<0.000000e+00> : vector<8xf32>
    %163 = vector.multi_reduction <add>, %162, %cst_97 [1] : vector<8x8xf32> to vector<8xf32>
    %164 = vector.shape_cast %163 : vector<8xf32> to vector<8x1xf32>
    %cst_98 = arith.constant 9.99999996E-13 : f32
    %165 = vector.broadcast %cst_98 : f32 to vector<8x1xf32>
    %166 = arith.addf %164, %165 : vector<8x1xf32>
    %167 = arith.divf %63, %166 : vector<8x1xf32>
    %168 = vector.broadcast %167 : vector<8x1xf32> to vector<8x8xf32>
    %169 = arith.mulf %162, %168 : vector<8x8xf32>
    %cst_99 = arith.constant dense<0.000000e+00> : vector<8xf32>
    %170 = vector.multi_reduction <add>, %169, %cst_99 [0] : vector<8x8xf32> to vector<8xf32>
    %171 = vector.shape_cast %170 : vector<8xf32> to vector<1x8xf32>
    %cst_100 = arith.constant 9.99999996E-13 : f32
    %172 = vector.broadcast %cst_100 : f32 to vector<1x8xf32>
    %173 = arith.addf %171, %172 : vector<1x8xf32>
    %174 = arith.divf %64, %173 : vector<1x8xf32>
    %175 = vector.broadcast %174 : vector<1x8xf32> to vector<8x8xf32>
    %176 = arith.mulf %169, %175 : vector<8x8xf32>
    %cst_101 = arith.constant dense<0.000000e+00> : vector<8xf32>
    %177 = vector.multi_reduction <add>, %176, %cst_101 [1] : vector<8x8xf32> to vector<8xf32>
    %178 = vector.shape_cast %177 : vector<8xf32> to vector<8x1xf32>
    %cst_102 = arith.constant 9.99999996E-13 : f32
    %179 = vector.broadcast %cst_102 : f32 to vector<8x1xf32>
    %180 = arith.addf %178, %179 : vector<8x1xf32>
    %181 = arith.divf %63, %180 : vector<8x1xf32>
    %182 = vector.broadcast %181 : vector<8x1xf32> to vector<8x8xf32>
    %183 = arith.mulf %176, %182 : vector<8x8xf32>
    %cst_103 = arith.constant dense<0.000000e+00> : vector<8xf32>
    %184 = vector.multi_reduction <add>, %183, %cst_103 [0] : vector<8x8xf32> to vector<8xf32>
    %185 = vector.shape_cast %184 : vector<8xf32> to vector<1x8xf32>
    %cst_104 = arith.constant 9.99999996E-13 : f32
    %186 = vector.broadcast %cst_104 : f32 to vector<1x8xf32>
    %187 = arith.addf %185, %186 : vector<1x8xf32>
    %188 = arith.divf %64, %187 : vector<1x8xf32>
    %189 = vector.broadcast %188 : vector<1x8xf32> to vector<8x8xf32>
    %190 = arith.mulf %183, %189 : vector<8x8xf32>
    %cst_105 = arith.constant dense<0.000000e+00> : vector<8xf32>
    %191 = vector.multi_reduction <add>, %190, %cst_105 [1] : vector<8x8xf32> to vector<8xf32>
    %192 = vector.shape_cast %191 : vector<8xf32> to vector<8x1xf32>
    %cst_106 = arith.constant 9.99999996E-13 : f32
    %193 = vector.broadcast %cst_106 : f32 to vector<8x1xf32>
    %194 = arith.addf %192, %193 : vector<8x1xf32>
    %195 = arith.divf %63, %194 : vector<8x1xf32>
    %196 = vector.broadcast %195 : vector<8x1xf32> to vector<8x8xf32>
    %197 = arith.mulf %190, %196 : vector<8x8xf32>
    %cst_107 = arith.constant dense<0.000000e+00> : vector<8xf32>
    %198 = vector.multi_reduction <add>, %197, %cst_107 [0] : vector<8x8xf32> to vector<8xf32>
    %199 = vector.shape_cast %198 : vector<8xf32> to vector<1x8xf32>
    %cst_108 = arith.constant 9.99999996E-13 : f32
    %200 = vector.broadcast %cst_108 : f32 to vector<1x8xf32>
    %201 = arith.addf %199, %200 : vector<1x8xf32>
    %202 = arith.divf %64, %201 : vector<1x8xf32>
    %203 = vector.broadcast %202 : vector<1x8xf32> to vector<8x8xf32>
    %204 = arith.mulf %197, %203 : vector<8x8xf32>
    %c0_109 = arith.constant 0 : index
    %c0_110 = arith.constant 0 : index
    %205 = vector.load %arg11[%c0_109, %c0_110] : memref<8x8xf32, #tpu.memory_space<vmem>>, vector<8x8xf32>
    tpu.vector_store %arg11[%c0_109, %c0_110], %204 {strides = array<i32>} : memref<8x8xf32, #tpu.memory_space<vmem>>, vector<8x8xf32>,
    return
  }
}

</mosaic_0001>

<llo_original>
// kernel: tpu_custom_call.1
$region0: #{tpu_custom_call.1}
  #allocation0 [shape = 'u32[]', space=smem, size = 0x4, offset = 0x4, fixed_abs, tag = 'smem constant byte address 0x4 - core index']
  #allocation1 [shape = 'u32[144,128]{1,0:T(1,128)}', space=vmem, size = 0x12000, scoped, tag = 'internal scratch']
  #allocation2 [shape = 'f32[8,8]{1,0:T(8,128)}', space=vmem, size = 0x1000, scoped, tag = 'scratch operand']
  %s0 = inlined_call_operand.vmem [shape: f32[1,16], index: 0, kind: input, shape index: {}]
  %s1 = inlined_call_operand.vmem [shape: f32[16,64], index: 1, kind: input, shape index: {}]
  %s2 = inlined_call_operand.vmem [shape: f32[1,64], index: 2, kind: input, shape index: {}]
  %s3 = inlined_call_operand.vmem [shape: f32[64,64], index: 3, kind: input, shape index: {}]
  %s4 = inlined_call_operand.vmem [shape: f32[1,64], index: 4, kind: input, shape index: {}]
  %s5 = inlined_call_operand.vmem [shape: f32[64,32], index: 5, kind: input, shape index: {}]
  %s6 = inlined_call_operand.vmem [shape: f32[1,32], index: 6, kind: input, shape index: {}]
  %s7 = inlined_call_operand.vmem [shape: f32[8,32,8], index: 7, kind: input, shape index: {}]
  %s8 = inlined_call_operand.vmem [shape: f32[8,8], index: 8, kind: input, shape index: {}]
  %s9 = inlined_call_operand.vmem [shape: f32[8,1], index: 9, kind: input, shape index: {}]
  %s10 = inlined_call_operand.vmem [shape: f32[1,8], index: 10, kind: input, shape index: {}]
  %s11 = inlined_call_operand.hbm [shape: f32[8,8], index: 11, kind: output, shape index: {}]
  %s12 = sld [smem:[#allocation0]]
  $region54: #{tpu_custom_call.1} parent=0
    _
  %s14 = ssub.s32 1, %s12
  %s15 = scalar_select 0, %s14, %s12
  $region1: #{tpu_custom_call.1} parent=0
    #allocation3 [shape = 'u8[4096]{0}', space=vmem, size = 0x1000, scoped, tag = 'output window, operand 0, single buffered']
    #allocation4 [shape = 's32[1]{0}', space=sflag, size = 0x4, scoped, tag = 'scoped memory for tpu_custom_call.1']
    %16 = vsyncpa [#allocation4], 0
    // Predicated region
    $region2: #{tpu_custom_call.1} parent=1 // pred_check
      _
    $region3: #{tpu_custom_call.1} parent=1 // pred_check_branch
      %18 = sbr.rel (0) target = $region5
    $region4: #{tpu_custom_call.1} parent=1 // pred_region
      _
    $region5: #{tpu_custom_call.1} parent=1 // pred_fallthru
      _
    // Predicated region
    $region6: #{tpu_custom_call.1} parent=1 // pred_check
      _
    $region7: #{tpu_custom_call.1} parent=1 // pred_check_branch
      %20 = sbr.rel (0) target = $region9
    $region8: #{tpu_custom_call.1} parent=1 // pred_region
      _
    $region9: #{tpu_custom_call.1} parent=1 // pred_fallthru
      _
    // Predicated region
    $region10: #{tpu_custom_call.1} parent=1 // pred_check
      _
    $region11: #{tpu_custom_call.1} parent=1 // pred_check_branch
      %22 = sbr.rel (0) target = $region13
    $region12: #{tpu_custom_call.1} parent=1 // pred_region
      _
    $region13: #{tpu_custom_call.1} parent=1 // pred_fallthru
      _
    // Predicated region
    $region14: #{tpu_custom_call.1} parent=1 // pred_check
      _
    $region15: #{tpu_custom_call.1} parent=1 // pred_check_branch
      %24 = sbr.rel (0) target = $region17
    $region16: #{tpu_custom_call.1} parent=1 // pred_region
      _
    $region17: #{tpu_custom_call.1} parent=1 // pred_fallthru
      _
    // Predicated region
    $region18: #{tpu_custom_call.1} parent=1 // pred_check
      _
    $region19: #{tpu_custom_call.1} parent=1 // pred_check_branch
      %26 = sbr.rel (0) target = $region21
    $region20: #{tpu_custom_call.1} parent=1 // pred_region
      _
    $region21: #{tpu_custom_call.1} parent=1 // pred_fallthru
      _
    // Predicated region
    $region22: #{tpu_custom_call.1} parent=1 // pred_check
      _
    $region23: #{tpu_custom_call.1} parent=1 // pred_check_branch
      %28 = sbr.rel (0) target = $region25
    $region24: #{tpu_custom_call.1} parent=1 // pred_region
      _
    $region25: #{tpu_custom_call.1} parent=1 // pred_fallthru
      _
    // Predicated region
    $region26: #{tpu_custom_call.1} parent=1 // pred_check
      _
    $region27: #{tpu_custom_call.1} parent=1 // pred_check_branch
      %30 = sbr.rel (0) target = $region29
    $region28: #{tpu_custom_call.1} parent=1 // pred_region
      _
    $region29: #{tpu_custom_call.1} parent=1 // pred_fallthru
      _
    // Predicated region
    $region30: #{tpu_custom_call.1} parent=1 // pred_check
      _
    $region31: #{tpu_custom_call.1} parent=1 // pred_check_branch
      %32 = sbr.rel (0) target = $region33
    $region32: #{tpu_custom_call.1} parent=1 // pred_region
      _
    $region33: #{tpu_custom_call.1} parent=1 // pred_fallthru
      _
    // Predicated region
    $region34: #{tpu_custom_call.1} parent=1 // pred_check
      _
    $region35: #{tpu_custom_call.1} parent=1 // pred_check_branch
      %34 = sbr.rel (0) target = $region37
    $region36: #{tpu_custom_call.1} parent=1 // pred_region
      _
    $region37: #{tpu_custom_call.1} parent=1 // pred_fallthru
      _
    // Predicated region
    $region38: #{tpu_custom_call.1} parent=1 // pred_check
      _
    $region39: #{tpu_custom_call.1} parent=1 // pred_check_branch
      %36 = sbr.rel (0) target = $region41
    $region40: #{tpu_custom_call.1} parent=1 // pred_region
      _
    $region41: #{tpu_custom_call.1} parent=1 // pred_fallthru
      _
    // Predicated region
    $region42: #{tpu_custom_call.1} parent=1 // pred_check
      _
    $region43: #{tpu_custom_call.1} parent=1 // pred_check_branch
      %38 = sbr.rel (0) target = $region45
    $region44: #{tpu_custom_call.1} parent=1 // pred_region
      _
    $region45: #{tpu_custom_call.1} parent=1 // pred_fallthru
      _
    %v39 = vld [vmem:[%s0] sm:$0x1]
    %v40 = vld [vmem:[%s1] sm:$0xff]
    %v41 = vld [vmem:[%s1 + $0x8] sm:$0xff]
    %v42 = vld [vmem:[%s2] sm:$0x1]
    %vm43 = vcmask 130048
    %v45 = vsel %vm43, %v39, 0
    %47 = vmatprep.subr.mxu0 0.0
    %48 = vmatpush1.msra.mxu0 %v40
    %49 = vmatprep.subr.mxu0 0.0
    %50 = vmatpush1.msra.mxu0 %v41
    %51 = vmatprep.subr.mxu0 0.0
    %52 = vmatpush1.msra.mxu0 0.0
    %53 = vmatprep.subr.mxu0 0.0
    %54 = vmatpush1.msra.mxu0 0.0
    %55 = vmatprep.subr.mxu0 0.0
    %56 = vmatpush1.msra.mxu0 0.0
    %57 = vmatprep.subr.mxu0 0.0
    %58 = vmatpush1.msra.mxu0 0.0
    %59 = vmatprep.subr.mxu0 0.0
    %60 = vmatpush1.msra.mxu0 0.0
    %61 = vmatprep.subr.mxu0 0.0
    %62 = vmatpush1.msra.mxu0 0.0
    %63 = vmatprep.subr.mxu0 0.0
    %64 = vmatpush1.msra.mxu0 0.0
    %65 = vmatprep.subr.mxu0 0.0
    %66 = vmatpush1.msra.mxu0 0.0
    %67 = vmatprep.subr.mxu0 0.0
    %68 = vmatpush1.msra.mxu0 0.0
    %69 = vmatprep.subr.mxu0 0.0
    %70 = vmatpush1.msra.mxu0 0.0
    %71 = vmatprep.subr.mxu0 0.0
    %72 = vmatpush1.msra.mxu0 0.0
    %73 = vmatprep.subr.mxu0 0.0
    %74 = vmatpush1.msra.mxu0 0.0
    %75 = vmatprep.subr.mxu0 0.0
    %76 = vmatpush1.msra.mxu0 0.0
    %77 = vmatprep.subr.mxu0 0.0
    %78 = vmatpush1.msra.mxu0 0.0
    %79 = vmatprep.subr.mxu0 0.0
    %80 = vmatpush1.msra.mxu0 0.0
    %81 = vmatprep.subr.mxu0 0.0
    %82 = vmatpush1.msra.mxu0 0.0
    %83 = vmatprep.subr.mxu0 0.0
    %84 = vmatpush1.msra.mxu0 0.0
    %85 = vmatprep.subr.mxu0 0.0
    %86 = vmatpush1.msra.mxu0 0.0
    %87 = vmatprep.subr.mxu0 0.0
    %88 = vmatpush1.msra.mxu0 0.0
    %89 = vmatprep.subr.mxu0 0.0
    %90 = vmatpush1.msra.mxu0 0.0
    %91 = vmatprep.subr.mxu0 0.0
    %92 = vmatpush1.msra.mxu0 0.0
    %93 = vmatprep.subr.mxu0 0.0
    %94 = vmatpush1.msra.mxu0 0.0
    %95 = vmatprep.subr.mxu0 0.0
    %96 = vmatpush1.msra.mxu0 0.0
    %97 = vmatprep.subr.mxu0 0.0
    %98 = vmatpush1.msra.mxu0 0.0
    %99 = vmatprep.subr.mxu0 0.0
    %100 = vmatpush1.msra.mxu0 0.0
    %101 = vmatprep.subr.mxu0 0.0
    %102 = vmatpush1.msra.mxu0 0.0
    %103 = vmatprep.subr.mxu0 0.0
    %104 = vmatpush1.msra.mxu0 0.0
    %105 = vmatprep.subr.mxu0 0.0
    %106 = vmatpush1.msra.mxu0 0.0
    %107 = vmatprep.subr.mxu0 0.0
    %108 = vmatpush1.msra.mxu0 0.0
    %109 = vmatprep.subr.mxu0 0.0
    %110 = vmatpush1.msra.mxu0 0.0
    %111 = vmatprep.mubr.f32.mxu0 0.0
    %112 = vmatmul.mubr.f32.gmra.mrb[0].mxu0 %v45
    %v113 = vpop.f32.mrb[0].mxu0
    %v114 = vadd.f32 %v42, %v113
    %v115 = vpop.f32.mrb[0].mxu0
    %116 = vdwg.mxu0
    %v117 = vmax.f32 %v114, 0.0
    %v118 = vld [vmem:[%s3] sm:$0xff]
    %v119 = vld [vmem:[%s3 + $0x8] sm:$0xff]
    %v120 = vld [vmem:[%s3 + $0x10] sm:$0xff]
    %v121 = vld [vmem:[%s3 + $0x18] sm:$0xff]
    %v122 = vld [vmem:[%s3 + $0x20] sm:$0xff]
    %v123 = vld [vmem:[%s3 + $0x28] sm:$0xff]
    %v124 = vld [vmem:[%s3 + $0x30] sm:$0xff]
    %v125 = vld [vmem:[%s3 + $0x38] sm:$0xff]
    %v126 = vld [vmem:[%s4] sm:$0x1]
    %vm127 = vcmask 523264
    %v129 = vsel %vm127, %v117, 0
    %131 = vmatprep.subr.mxu0 0.0
    %132 = vmatpush1.msra.mxu0 %v118
    %133 = vmatprep.subr.mxu0 0.0
    %134 = vmatpush1.msra.mxu0 %v119
    %135 = vmatprep.subr.mxu0 0.0
    %136 = vmatpush1.msra.mxu0 %v120
    %137 = vmatprep.subr.mxu0 0.0
    %138 = vmatpush1.msra.mxu0 %v121
    %139 = vmatprep.subr.mxu0 0.0
    %140 = vmatpush1.msra.mxu0 %v122
    %141 = vmatprep.subr.mxu0 0.0
    %142 = vmatpush1.msra.mxu0 %v123
    %143 = vmatprep.subr.mxu0 0.0
    %144 = vmatpush1.msra.mxu0 %v124
    %145 = vmatprep.subr.mxu0 0.0
    %146 = vmatpush1.msra.mxu0 %v125
    %147 = vmatprep.subr.mxu0 0.0
    %148 = vmatpush1.msra.mxu0 0.0
    %149 = vmatprep.subr.mxu0 0.0
    %150 = vmatpush1.msra.mxu0 0.0
    %151 = vmatprep.subr.mxu0 0.0
    %152 = vmatpush1.msra.mxu0 0.0
    %153 = vmatprep.subr.mxu0 0.0
    %154 = vmatpush1.msra.mxu0 0.0
    %155 = vmatprep.subr.mxu0 0.0
    %156 = vmatpush1.msra.mxu0 0.0
    %157 = vmatprep.subr.mxu0 0.0
    %158 = vmatpush1.msra.mxu0 0.0
    %159 = vmatprep.subr.mxu0 0.0
    %160 = vmatpush1.msra.mxu0 0.0
    %161 = vmatprep.subr.mxu0 0.0
    %162 = vmatpush1.msra.mxu0 0.0
    %163 = vmatprep.subr.mxu0 0.0
    %164 = vmatpush1.msra.mxu0 0.0
    %165 = vmatprep.subr.mxu0 0.0
    %166 = vmatpush1.msra.mxu0 0.0
    %167 = vmatprep.subr.mxu0 0.0
    %168 = vmatpush1.msra.mxu0 0.0
    %169 = vmatprep.subr.mxu0 0.0
    %170 = vmatpush1.msra.mxu0 0.0
    %171 = vmatprep.subr.mxu0 0.0
    %172 = vmatpush1.msra.mxu0 0.0
    %173 = vmatprep.subr.mxu0 0.0
    %174 = vmatpush1.msra.mxu0 0.0
    %175 = vmatprep.subr.mxu0 0.0
    %176 = vmatpush1.msra.mxu0 0.0
    %177 = vmatprep.subr.mxu0 0.0
    %178 = vmatpush1.msra.mxu0 0.0
    %179 = vmatprep.subr.mxu0 0.0
    %180 = vmatpush1.msra.mxu0 0.0
    %181 = vmatprep.subr.mxu0 0.0
    %182 = vmatpush1.msra.mxu0 0.0
    %183 = vmatprep.subr.mxu0 0.0
    %184 = vmatpush1.msra.mxu0 0.0
    %185 = vmatprep.subr.mxu0 0.0
    %186 = vmatpush1.msra.mxu0 0.0
    %187 = vmatprep.subr.mxu0 0.0
    %188 = vmatpush1.msra.mxu0 0.0
    %189 = vmatprep.subr.mxu0 0.0
    %190 = vmatpush1.msra.mxu0 0.0
    %191 = vmatprep.subr.mxu0 0.0
    %192 = vmatpush1.msra.mxu0 0.0
    %193 = vmatprep.subr.mxu0 0.0
    %194 = vmatpush1.msra.mxu0 0.0
    %195 = vmatprep.mubr.f32.mxu0 0.0
    %196 = vmatmul.mubr.f32.gmra.mrb[0].mxu0 %v129
    %v197 = vpop.f32.mrb[0].mxu0
    %v198 = vadd.f32 %v126, %v197
    %v199 = vpop.f32.mrb[0].mxu0
    %200 = vdwg.mxu0
    %v201 = vmax.f32 %v198, 0.0
    %v202 = vld [vmem:[%s5] sm:$0xff]
    %v203 = vld [vmem:[%s5 + $0x8] sm:$0xff]
    %v204 = vld [vmem:[%s5 + $0x10] sm:$0xff]
    %v205 = vld [vmem:[%s5 + $0x18] sm:$0xff]
    %v206 = vld [vmem:[%s5 + $0x20] sm:$0xff]
    %v207 = vld [vmem:[%s5 + $0x28] sm:$0xff]
    %v208 = vld [vmem:[%s5 + $0x30] sm:$0xff]
    %v209 = vld [vmem:[%s5 + $0x38] sm:$0xff]
    %v210 = vld [vmem:[%s6] sm:$0x1]
    %v212 = vsel %vm127, %v201, 0
    %214 = vmatprep.subr.mxu0 0.0
    %215 = vmatpush1.msra.mxu0 %v202
    %216 = vmatprep.subr.mxu0 0.0
    %217 = vmatpush1.msra.mxu0 %v203
    %218 = vmatprep.subr.mxu0 0.0
    %219 = vmatpush1.msra.mxu0 %v204
    %220 = vmatprep.subr.mxu0 0.0
    %221 = vmatpush1.msra.mxu0 %v205
    %222 = vmatprep.subr.mxu0 0.0
    %223 = vmatpush1.msra.mxu0 %v206
    %224 = vmatprep.subr.mxu0 0.0
    %225 = vmatpush1.msra.mxu0 %v207
    %226 = vmatprep.subr.mxu0 0.0
    %227 = vmatpush1.msra.mxu0 %v208
    %228 = vmatprep.subr.mxu0 0.0
    %229 = vmatpush1.msra.mxu0 %v209
    %230 = vmatprep.subr.mxu0 0.0
    %231 = vmatpush1.msra.mxu0 0.0
    %232 = vmatprep.subr.mxu0 0.0
    %233 = vmatpush1.msra.mxu0 0.0
    %234 = vmatprep.subr.mxu0 0.0
    %235 = vmatpush1.msra.mxu0 0.0
    %236 = vmatprep.subr.mxu0 0.0
    %237 = vmatpush1.msra.mxu0 0.0
    %238 = vmatprep.subr.mxu0 0.0
    %239 = vmatpush1.msra.mxu0 0.0
    %240 = vmatprep.subr.mxu0 0.0
    %241 = vmatpush1.msra.mxu0 0.0
    %242 = vmatprep.subr.mxu0 0.0
    %243 = vmatpush1.msra.mxu0 0.0
    %244 = vmatprep.subr.mxu0 0.0
    %245 = vmatpush1.msra.mxu0 0.0
    %246 = vmatprep.subr.mxu0 0.0
    %247 = vmatpush1.msra.mxu0 0.0
    %248 = vmatprep.subr.mxu0 0.0
    %249 = vmatpush1.msra.mxu0 0.0
    %250 = vmatprep.subr.mxu0 0.0
    %251 = vmatpush1.msra.mxu0 0.0
    %252 = vmatprep.subr.mxu0 0.0
    %253 = vmatpush1.msra.mxu0 0.0
    %254 = vmatprep.subr.mxu0 0.0
    %255 = vmatpush1.msra.mxu0 0.0
    %256 = vmatprep.subr.mxu0 0.0
    %257 = vmatpush1.msra.mxu0 0.0
    %258 = vmatprep.subr.mxu0 0.0
    %259 = vmatpush1.msra.mxu0 0.0
    %260 = vmatprep.subr.mxu0 0.0
    %261 = vmatpush1.msra.mxu0 0.0
    %262 = vmatprep.subr.mxu0 0.0
    %263 = vmatpush1.msra.mxu0 0.0
    %264 = vmatprep.subr.mxu0 0.0
    %265 = vmatpush1.msra.mxu0 0.0
    %266 = vmatprep.subr.mxu0 0.0
    %267 = vmatpush1.msra.mxu0 0.0
    %268 = vmatprep.subr.mxu0 0.0
    %269 = vmatpush1.msra.mxu0 0.0
    %270 = vmatprep.subr.mxu0 0.0
    %271 = vmatpush1.msra.mxu0 0.0
    %272 = vmatprep.subr.mxu0 0.0
    %273 = vmatpush1.msra.mxu0 0.0
    %274 = vmatprep.subr.mxu0 0.0
    %275 = vmatpush1.msra.mxu0 0.0
    %276 = vmatprep.subr.mxu0 0.0
    %277 = vmatpush1.msra.mxu0 0.0
    %278 = vmatprep.mubr.f32.mxu0 0.0
    %279 = vmatmul.mubr.f32.gmra.mrb[0].mxu0 %v212
    %v280 = vpop.f32.mrb[0].mxu0
    %v281 = vadd.f32 %v210, %v280
    %v282 = vpop.f32.mrb[0].mxu0
    %283 = vdwg.mxu0
    %v284 = vmax.f32 %v281, 0.0
    %v285 = vld [vmem:[%s7] sm:$0xff]
    %v286 = vld [vmem:[%s7 + $0x8] sm:$0xff]
    %v287 = vld [vmem:[%s7 + $0x10] sm:$0xff]
    %v288 = vld [vmem:[%s7 + $0x18] sm:$0xff]
    %vm289 = vcmask 261120
    %v291 = vsel %vm289, %v284, 0
    %293 = vmatprep.subr.mxu0 0.0
    %294 = vmatpush1.msra.mxu0 %v285
    %295 = vmatprep.subr.mxu0 0.0
    %296 = vmatpush1.msra.mxu0 %v286
    %297 = vmatprep.subr.mxu0 0.0
    %298 = vmatpush1.msra.mxu0 %v287
    %299 = vmatprep.subr.mxu0 0.0
    %300 = vmatpush1.msra.mxu0 %v288
    %301 = vmatprep.subr.mxu0 0.0
    %302 = vmatpush1.msra.mxu0 0.0
    %303 = vmatprep.subr.mxu0 0.0
    %304 = vmatpush1.msra.mxu0 0.0
    %305 = vmatprep.subr.mxu0 0.0
    %306 = vmatpush1.msra.mxu0 0.0
    %307 = vmatprep.subr.mxu0 0.0
    %308 = vmatpush1.msra.mxu0 0.0
    %309 = vmatprep.subr.mxu0 0.0
    %310 = vmatpush1.msra.mxu0 0.0
    %311 = vmatprep.subr.mxu0 0.0
    %312 = vmatpush1.msra.mxu0 0.0
    %313 = vmatprep.subr.mxu0 0.0
    %314 = vmatpush1.msra.mxu0 0.0
    %315 = vmatprep.subr.mxu0 0.0
    %316 = vmatpush1.msra.mxu0 0.0
    %317 = vmatprep.subr.mxu0 0.0
    %318 = vmatpush1.msra.mxu0 0.0
    %319 = vmatprep.subr.mxu0 0.0
    %320 = vmatpush1.msra.mxu0 0.0
    %321 = vmatprep.subr.mxu0 0.0
    %322 = vmatpush1.msra.mxu0 0.0
    %323 = vmatprep.subr.mxu0 0.0
    %324 = vmatpush1.msra.mxu0 0.0
    %325 = vmatprep.subr.mxu0 0.0
    %326 = vmatpush1.msra.mxu0 0.0
    %327 = vmatprep.subr.mxu0 0.0
    %328 = vmatpush1.msra.mxu0 0.0
    %329 = vmatprep.subr.mxu0 0.0
    %330 = vmatpush1.msra.mxu0 0.0
    %331 = vmatprep.subr.mxu0 0.0
    %332 = vmatpush1.msra.mxu0 0.0
    %333 = vmatprep.subr.mxu0 0.0
    %334 = vmatpush1.msra.mxu0 0.0
    %335 = vmatprep.subr.mxu0 0.0
    %336 = vmatpush1.msra.mxu0 0.0
    %337 = vmatprep.subr.mxu0 0.0
    %338 = vmatpush1.msra.mxu0 0.0
    %339 = vmatprep.subr.mxu0 0.0
    %340 = vmatpush1.msra.mxu0 0.0
    %341 = vmatprep.subr.mxu0 0.0
    %342 = vmatpush1.msra.mxu0 0.0
    %343 = vmatprep.subr.mxu0 0.0
    %344 = vmatpush1.msra.mxu0 0.0
    %345 = vmatprep.subr.mxu0 0.0
    %346 = vmatpush1.msra.mxu0 0.0
    %347 = vmatprep.subr.mxu0 0.0
    %348 = vmatpush1.msra.mxu0 0.0
    %349 = vmatprep.subr.mxu0 0.0
    %350 = vmatpush1.msra.mxu0 0.0
    %351 = vmatprep.subr.mxu0 0.0
    %352 = vmatpush1.msra.mxu0 0.0
    %353 = vmatprep.subr.mxu0 0.0
    %354 = vmatpush1.msra.mxu0 0.0
    %355 = vmatprep.subr.mxu0 0.0
    %356 = vmatpush1.msra.mxu0 0.0
    %357 = vmatprep.mubr.f32.mxu0 0.0
    %358 = vmatmul.mubr.f32.gmra.mrb[0].mxu0 %v291
    %v359 = vpop.f32.mrb[0].mxu0
    %v360 = vadd.f32 0.0, %v359
    %v361 = vpop.f32.mrb[0].mxu0
    %362 = vdwg.mxu0
    %vm363 = vcmask 57344
    %364 = vst.msk [vmem:[#allocation2] sm:$0x1] %vm363, %v360
    %s365 = scalar_lea.vmem %s7, 32
    %v366 = vld [vmem:[%s365] sm:$0xff]
    %v367 = vld [vmem:[%s365 + $0x8] sm:$0xff]
    %v368 = vld [vmem:[%s365 + $0x10] sm:$0xff]
    %v369 = vld [vmem:[%s365 + $0x18] sm:$0xff]
    %370 = vmatprep.subr.mxu0 0.0
    %371 = vmatpush1.msra.mxu0 %v366
    %372 = vmatprep.subr.mxu0 0.0
    %373 = vmatpush1.msra.mxu0 %v367
    %374 = vmatprep.subr.mxu0 0.0
    %375 = vmatpush1.msra.mxu0 %v368
    %376 = vmatprep.subr.mxu0 0.0
    %377 = vmatpush1.msra.mxu0 %v369
    %378 = vmatprep.subr.mxu0 0.0
    %379 = vmatpush1.msra.mxu0 0.0
    %380 = vmatprep.subr.mxu0 0.0
    %381 = vmatpush1.msra.mxu0 0.0
    %382 = vmatprep.subr.mxu0 0.0
    %383 = vmatpush1.msra.mxu0 0.0
    %384 = vmatprep.subr.mxu0 0.0
    %385 = vmatpush1.msra.mxu0 0.0
    %386 = vmatprep.subr.mxu0 0.0
    %387 = vmatpush1.msra.mxu0 0.0
    %388 = vmatprep.subr.mxu0 0.0
    %389 = vmatpush1.msra.mxu0 0.0
    %390 = vmatprep.subr.mxu0 0.0
    %391 = vmatpush1.msra.mxu0 0.0
    %392 = vmatprep.subr.mxu0 0.0
    %393 = vmatpush1.msra.mxu0 0.0
    %394 = vmatprep.subr.mxu0 0.0
    %395 = vmatpush1.msra.mxu0 0.0
    %396 = vmatprep.subr.mxu0 0.0
    %397 = vmatpush1.msra.mxu0 0.0
    %398 = vmatprep.subr.mxu0 0.0
    %399 = vmatpush1.msra.mxu0 0.0
    %400 = vmatprep.subr.mxu0 0.0
    %401 = vmatpush1.msra.mxu0 0.0
    %402 = vmatprep.subr.mxu0 0.0
    %403 = vmatpush1.msra.mxu0 0.0
    %404 = vmatprep.subr.mxu0 0.0
    %405 = vmatpush1.msra.mxu0 0.0
    %406 = vmatprep.subr.mxu0 0.0
    %407 = vmatpush1.msra.mxu0 0.0
    %408 = vmatprep.subr.mxu0 0.0
    %409 = vmatpush1.msra.mxu0 0.0
    %410 = vmatprep.subr.mxu0 0.0
    %411 = vmatpush1.msra.mxu0 0.0
    %412 = vmatprep.subr.mxu0 0.0
    %413 = vmatpush1.msra.mxu0 0.0
    %414 = vmatprep.subr.mxu0 0.0
    %415 = vmatpush1.msra.mxu0 0.0
    %416 = vmatprep.subr.mxu0 0.0
    %417 = vmatpush1.msra.mxu0 0.0
    %418 = vmatprep.subr.mxu0 0.0
    %419 = vmatpush1.msra.mxu0 0.0
    %420 = vmatprep.subr.mxu0 0.0
    %421 = vmatpush1.msra.mxu0 0.0
    %422 = vmatprep.subr.mxu0 0.0
    %423 = vmatpush1.msra.mxu0 0.0
    %424 = vmatprep.subr.mxu0 0.0
    %425 = vmatpush1.msra.mxu0 0.0
    %426 = vmatprep.subr.mxu0 0.0
    %427 = vmatpush1.msra.mxu0 0.0
    %428 = vmatprep.subr.mxu0 0.0
    %429 = vmatpush1.msra.mxu0 0.0
    %430 = vmatprep.subr.mxu0 0.0
    %431 = vmatpush1.msra.mxu0 0.0
    %432 = vmatprep.subr.mxu0 0.0
    %433 = vmatpush1.msra.mxu0 0.0
    %434 = vmatprep.mubr.f32.mxu0 0.0
    %435 = vmatmul.mubr.f32.gmra.mrb[0].mxu0 %v291
    %v436 = vpop.f32.mrb[0].mxu0
    %v437 = vadd.f32 0.0, %v436
    %v438 = vpop.f32.mrb[0].mxu0
    %439 = vdwg.mxu0
    %440 = vst.msk [vmem:[#allocation2 + $0x1] sm:$0x1] %vm363, %v437
    %s441 = scalar_lea.vmem %s7, 64
    %v442 = vld [vmem:[%s441] sm:$0xff]
    %v443 = vld [vmem:[%s441 + $0x8] sm:$0xff]
    %v444 = vld [vmem:[%s441 + $0x10] sm:$0xff]
    %v445 = vld [vmem:[%s441 + $0x18] sm:$0xff]
    %446 = vmatprep.subr.mxu0 0.0
    %447 = vmatpush1.msra.mxu0 %v442
    %448 = vmatprep.subr.mxu0 0.0
    %449 = vmatpush1.msra.mxu0 %v443
    %450 = vmatprep.subr.mxu0 0.0
    %451 = vmatpush1.msra.mxu0 %v444
    %452 = vmatprep.subr.mxu0 0.0
    %453 = vmatpush1.msra.mxu0 %v445
    %454 = vmatprep.subr.mxu0 0.0
    %455 = vmatpush1.msra.mxu0 0.0
    %456 = vmatprep.subr.mxu0 0.0
    %457 = vmatpush1.msra.mxu0 0.0
    %458 = vmatprep.subr.mxu0 0.0
    %459 = vmatpush1.msra.mxu0 0.0
    %460 = vmatprep.subr.mxu0 0.0
    %461 = vmatpush1.msra.mxu0 0.0
    %462 = vmatprep.subr.mxu0 0.0
    %463 = vmatpush1.msra.mxu0 0.0
    %464 = vmatprep.subr.mxu0 0.0
    %465 = vmatpush1.msra.mxu0 0.0
    %466 = vmatprep.subr.mxu0 0.0
    %467 = vmatpush1.msra.mxu0 0.0
    %468 = vmatprep.subr.mxu0 0.0
    %469 = vmatpush1.msra.mxu0 0.0
    %470 = vmatprep.subr.mxu0 0.0
    %471 = vmatpush1.msra.mxu0 0.0
    %472 = vmatprep.subr.mxu0 0.0
    %473 = vmatpush1.msra.mxu0 0.0
    %474 = vmatprep.subr.mxu0 0.0
    %475 = vmatpush1.msra.mxu0 0.0
    %476 = vmatprep.subr.mxu0 0.0
    %477 = vmatpush1.msra.mxu0 0.0
    %478 = vmatprep.subr.mxu0 0.0
    %479 = vmatpush1.msra.mxu0 0.0
    %480 = vmatprep.subr.mxu0 0.0
    %481 = vmatpush1.msra.mxu0 0.0
    %482 = vmatprep.subr.mxu0 0.0
    %483 = vmatpush1.msra.mxu0 0.0
    %484 = vmatprep.subr.mxu0 0.0
    %485 = vmatpush1.msra.mxu0 0.0
    %486 = vmatprep.subr.mxu0 0.0
    %487 = vmatpush1.msra.mxu0 0.0
    %488 = vmatprep.subr.mxu0 0.0
    %489 = vmatpush1.msra.mxu0 0.0
    %490 = vmatprep.subr.mxu0 0.0
    %491 = vmatpush1.msra.mxu0 0.0
    %492 = vmatprep.subr.mxu0 0.0
    %493 = vmatpush1.msra.mxu0 0.0
    %494 = vmatprep.subr.mxu0 0.0
    %495 = vmatpush1.msra.mxu0 0.0
    %496 = vmatprep.subr.mxu0 0.0
    %497 = vmatpush1.msra.mxu0 0.0
    %498 = vmatprep.subr.mxu0 0.0
    %499 = vmatpush1.msra.mxu0 0.0
    %500 = vmatprep.subr.mxu0 0.0
    %501 = vmatpush1.msra.mxu0 0.0
    %502 = vmatprep.subr.mxu0 0.0
    %503 = vmatpush1.msra.mxu0 0.0
    %504 = vmatprep.subr.mxu0 0.0
    %505 = vmatpush1.msra.mxu0 0.0
    %506 = vmatprep.subr.mxu0 0.0
    %507 = vmatpush1.msra.mxu0 0.0
    %508 = vmatprep.subr.mxu0 0.0
    %509 = vmatpush1.msra.mxu0 0.0
    %510 = vmatprep.mubr.f32.mxu0 0.0
    %511 = vmatmul.mubr.f32.gmra.mrb[0].mxu0 %v291
    %v512 = vpop.f32.mrb[0].mxu0
    %v513 = vadd.f32 0.0, %v512
    %v514 = vpop.f32.mrb[0].mxu0
    %515 = vdwg.mxu0
    %516 = vst.msk [vmem:[#allocation2 + $0x2] sm:$0x1] %vm363, %v513
    %s517 = scalar_lea.vmem %s7, 96
    %v518 = vld [vmem:[%s517] sm:$0xff]
    %v519 = vld [vmem:[%s517 + $0x8] sm:$0xff]
    %v520 = vld [vmem:[%s517 + $0x10] sm:$0xff]
    %v521 = vld [vmem:[%s517 + $0x18] sm:$0xff]
    %522 = vmatprep.subr.mxu0 0.0
    %523 = vmatpush1.msra.mxu0 %v518
    %524 = vmatprep.subr.mxu0 0.0
    %525 = vmatpush1.msra.mxu0 %v519
    %526 = vmatprep.subr.mxu0 0.0
    %527 = vmatpush1.msra.mxu0 %v520
    %528 = vmatprep.subr.mxu0 0.0
    %529 = vmatpush1.msra.mxu0 %v521
    %530 = vmatprep.subr.mxu0 0.0
    %531 = vmatpush1.msra.mxu0 0.0
    %532 = vmatprep.subr.mxu0 0.0
    %533 = vmatpush1.msra.mxu0 0.0
    %534 = vmatprep.subr.mxu0 0.0
    %535 = vmatpush1.msra.mxu0 0.0
    %536 = vmatprep.subr.mxu0 0.0
    %537 = vmatpush1.msra.mxu0 0.0
    %538 = vmatprep.subr.mxu0 0.0
    %539 = vmatpush1.msra.mxu0 0.0
    %540 = vmatprep.subr.mxu0 0.0
    %541 = vmatpush1.msra.mxu0 0.0
    %542 = vmatprep.subr.mxu0 0.0
    %543 = vmatpush1.msra.mxu0 0.0
    %544 = vmatprep.subr.mxu0 0.0
    %545 = vmatpush1.msra.mxu0 0.0
    %546 = vmatprep.subr.mxu0 0.0
    %547 = vmatpush1.msra.mxu0 0.0
    %548 = vmatprep.subr.mxu0 0.0
    %549 = vmatpush1.msra.mxu0 0.0
    %550 = vmatprep.subr.mxu0 0.0
    %551 = vmatpush1.msra.mxu0 0.0
    %552 = vmatprep.subr.mxu0 0.0
    %553 = vmatpush1.msra.mxu0 0.0
    %554 = vmatprep.subr.mxu0 0.0
    %555 = vmatpush1.msra.mxu0 0.0
    %556 = vmatprep.subr.mxu0 0.0
    %557 = vmatpush1.msra.mxu0 0.0
    %558 = vmatprep.subr.mxu0 0.0
    %559 = vmatpush1.msra.mxu0 0.0
    %560 = vmatprep.subr.mxu0 0.0
    %561 = vmatpush1.msra.mxu0 0.0
    %562 = vmatprep.subr.mxu0 0.0
    %563 = vmatpush1.msra.mxu0 0.0
    %564 = vmatprep.subr.mxu0 0.0
    %565 = vmatpush1.msra.mxu0 0.0
    %566 = vmatprep.subr.mxu0 0.0
    %567 = vmatpush1.msra.mxu0 0.0
    %568 = vmatprep.subr.mxu0 0.0
    %569 = vmatpush1.msra.mxu0 0.0
    %570 = vmatprep.subr.mxu0 0.0
    %571 = vmatpush1.msra.mxu0 0.0
    %572 = vmatprep.subr.mxu0 0.0
    %573 = vmatpush1.msra.mxu0 0.0
    %574 = vmatprep.subr.mxu0 0.0
    %575 = vmatpush1.msra.mxu0 0.0
    %576 = vmatprep.subr.mxu0 0.0
    %577 = vmatpush1.msra.mxu0 0.0
    %578 = vmatprep.subr.mxu0 0.0
    %579 = vmatpush1.msra.mxu0 0.0
    %580 = vmatprep.subr.mxu0 0.0
    %581 = vmatpush1.msra.mxu0 0.0
    %582 = vmatprep.subr.mxu0 0.0
    %583 = vmatpush1.msra.mxu0 0.0
    %584 = vmatprep.subr.mxu0 0.0
    %585 = vmatpush1.msra.mxu0 0.0
    %586 = vmatprep.mubr.f32.mxu0 0.0
    %587 = vmatmul.mubr.f32.gmra.mrb[0].mxu0 %v291
    %v588 = vpop.f32.mrb[0].mxu0
    %v589 = vadd.f32 0.0, %v588
    %v590 = vpop.f32.mrb[0].mxu0
    %591 = vdwg.mxu0
    %592 = vst.msk [vmem:[#allocation2 + $0x3] sm:$0x1] %vm363, %v589
    %s593 = scalar_lea.vmem %s7, 128
    %v594 = vld [vmem:[%s593] sm:$0xff]
    %v595 = vld [vmem:[%s593 + $0x8] sm:$0xff]
    %v596 = vld [vmem:[%s593 + $0x10] sm:$0xff]
    %v597 = vld [vmem:[%s593 + $0x18] sm:$0xff]
    %598 = vmatprep.subr.mxu0 0.0
    %599 = vmatpush1.msra.mxu0 %v594
    %600 = vmatprep.subr.mxu0 0.0
    %601 = vmatpush1.msra.mxu0 %v595
    %602 = vmatprep.subr.mxu0 0.0
    %603 = vmatpush1.msra.mxu0 %v596
    %604 = vmatprep.subr.mxu0 0.0
    %605 = vmatpush1.msra.mxu0 %v597
    %606 = vmatprep.subr.mxu0 0.0
    %607 = vmatpush1.msra.mxu0 0.0
    %608 = vmatprep.subr.mxu0 0.0
    %609 = vmatpush1.msra.mxu0 0.0
    %610 = vmatprep.subr.mxu0 0.0
    %611 = vmatpush1.msra.mxu0 0.0
    %612 = vmatprep.subr.mxu0 0.0
    %613 = vmatpush1.msra.mxu0 0.0
    %614 = vmatprep.subr.mxu0 0.0
    %615 = vmatpush1.msra.mxu0 0.0
    %616 = vmatprep.subr.mxu0 0.0
    %617 = vmatpush1.msra.mxu0 0.0
    %618 = vmatprep.subr.mxu0 0.0
    %619 = vmatpush1.msra.mxu0 0.0
    %620 = vmatprep.subr.mxu0 0.0
    %621 = vmatpush1.msra.mxu0 0.0
    %622 = vmatprep.subr.mxu0 0.0
    %623 = vmatpush1.msra.mxu0 0.0
    %624 = vmatprep.subr.mxu0 0.0
    %625 = vmatpush1.msra.mxu0 0.0
    %626 = vmatprep.subr.mxu0 0.0
    %627 = vmatpush1.msra.mxu0 0.0
    %628 = vmatprep.subr.mxu0 0.0
    %629 = vmatpush1.msra.mxu0 0.0
    %630 = vmatprep.subr.mxu0 0.0
    %631 = vmatpush1.msra.mxu0 0.0
    %632 = vmatprep.subr.mxu0 0.0
    %633 = vmatpush1.msra.mxu0 0.0
    %634 = vmatprep.subr.mxu0 0.0
    %635 = vmatpush1.msra.mxu0 0.0
    %636 = vmatprep.subr.mxu0 0.0
    %637 = vmatpush1.msra.mxu0 0.0
    %638 = vmatprep.subr.mxu0 0.0
    %639 = vmatpush1.msra.mxu0 0.0
    %640 = vmatprep.subr.mxu0 0.0
    %641 = vmatpush1.msra.mxu0 0.0
    %642 = vmatprep.subr.mxu0 0.0
    %643 = vmatpush1.msra.mxu0 0.0
    %644 = vmatprep.subr.mxu0 0.0
    %645 = vmatpush1.msra.mxu0 0.0
    %646 = vmatprep.subr.mxu0 0.0
    %647 = vmatpush1.msra.mxu0 0.0
    %648 = vmatprep.subr.mxu0 0.0
    %649 = vmatpush1.msra.mxu0 0.0
    %650 = vmatprep.subr.mxu0 0.0
    %651 = vmatpush1.msra.mxu0 0.0
    %652 = vmatprep.subr.mxu0 0.0
    %653 = vmatpush1.msra.mxu0 0.0
    %654 = vmatprep.subr.mxu0 0.0
    %655 = vmatpush1.msra.mxu0 0.0
    %656 = vmatprep.subr.mxu0 0.0
    %657 = vmatpush1.msra.mxu0 0.0
    %658 = vmatprep.subr.mxu0 0.0
    %659 = vmatpush1.msra.mxu0 0.0
    %660 = vmatprep.subr.mxu0 0.0
    %661 = vmatpush1.msra.mxu0 0.0
    %662 = vmatprep.mubr.f32.mxu0 0.0
    %663 = vmatmul.mubr.f32.gmra.mrb[0].mxu0 %v291
    %v664 = vpop.f32.mrb[0].mxu0
    %v665 = vadd.f32 0.0, %v664
    %v666 = vpop.f32.mrb[0].mxu0
    %667 = vdwg.mxu0
    %668 = vst.msk [vmem:[#allocation2 + $0x4] sm:$0x1] %vm363, %v665
    %s669 = scalar_lea.vmem %s7, 160
    %v670 = vld [vmem:[%s669] sm:$0xff]
    %v671 = vld [vmem:[%s669 + $0x8] sm:$0xff]
    %v672 = vld [vmem:[%s669 + $0x10] sm:$0xff]
    %v673 = vld [vmem:[%s669 + $0x18] sm:$0xff]
    %674 = vmatprep.subr.mxu0 0.0
    %675 = vmatpush1.msra.mxu0 %v670
    %676 = vmatprep.subr.mxu0 0.0
    %677 = vmatpush1.msra.mxu0 %v671
    %678 = vmatprep.subr.mxu0 0.0
    %679 = vmatpush1.msra.mxu0 %v672
    %680 = vmatprep.subr.mxu0 0.0
    %681 = vmatpush1.msra.mxu0 %v673
    %682 = vmatprep.subr.mxu0 0.0
    %683 = vmatpush1.msra.mxu0 0.0
    %684 = vmatprep.subr.mxu0 0.0
    %685 = vmatpush1.msra.mxu0 0.0
    %686 = vmatprep.subr.mxu0 0.0
    %687 = vmatpush1.msra.mxu0 0.0
    %688 = vmatprep.subr.mxu0 0.0
    %689 = vmatpush1.msra.mxu0 0.0
    %690 = vmatprep.subr.mxu0 0.0
    %691 = vmatpush1.msra.mxu0 0.0
    %692 = vmatprep.subr.mxu0 0.0
    %693 = vmatpush1.msra.mxu0 0.0
    %694 = vmatprep.subr.mxu0 0.0
    %695 = vmatpush1.msra.mxu0 0.0
    %696 = vmatprep.subr.mxu0 0.0
    %697 = vmatpush1.msra.mxu0 0.0
    %698 = vmatprep.subr.mxu0 0.0
    %699 = vmatpush1.msra.mxu0 0.0
    %700 = vmatprep.subr.mxu0 0.0
    %701 = vmatpush1.msra.mxu0 0.0
    %702 = vmatprep.subr.mxu0 0.0
    %703 = vmatpush1.msra.mxu0 0.0
    %704 = vmatprep.subr.mxu0 0.0
    %705 = vmatpush1.msra.mxu0 0.0
    %706 = vmatprep.subr.mxu0 0.0
    %707 = vmatpush1.msra.mxu0 0.0
    %708 = vmatprep.subr.mxu0 0.0
    %709 = vmatpush1.msra.mxu0 0.0
    %710 = vmatprep.subr.mxu0 0.0
    %711 = vmatpush1.msra.mxu0 0.0
    %712 = vmatprep.subr.mxu0 0.0
    %713 = vmatpush1.msra.mxu0 0.0
    %714 = vmatprep.subr.mxu0 0.0
    %715 = vmatpush1.msra.mxu0 0.0
    %716 = vmatprep.subr.mxu0 0.0
    %717 = vmatpush1.msra.mxu0 0.0
    %718 = vmatprep.subr.mxu0 0.0
    %719 = vmatpush1.msra.mxu0 0.0
    %720 = vmatprep.subr.mxu0 0.0
    %721 = vmatpush1.msra.mxu0 0.0
    %722 = vmatprep.subr.mxu0 0.0
    %723 = vmatpush1.msra.mxu0 0.0
    %724 = vmatprep.subr.mxu0 0.0
    %725 = vmatpush1.msra.mxu0 0.0
    %726 = vmatprep.subr.mxu0 0.0
    %727 = vmatpush1.msra.mxu0 0.0
    %728 = vmatprep.subr.mxu0 0.0
    %729 = vmatpush1.msra.mxu0 0.0
    %730 = vmatprep.subr.mxu0 0.0
    %731 = vmatpush1.msra.mxu0 0.0
    %732 = vmatprep.subr.mxu0 0.0
    %733 = vmatpush1.msra.mxu0 0.0
    %734 = vmatprep.subr.mxu0 0.0
    %735 = vmatpush1.msra.mxu0 0.0
    %736 = vmatprep.subr.mxu0 0.0
    %737 = vmatpush1.msra.mxu0 0.0
    %738 = vmatprep.mubr.f32.mxu0 0.0
    %739 = vmatmul.mubr.f32.gmra.mrb[0].mxu0 %v291
    %v740 = vpop.f32.mrb[0].mxu0
    %v741 = vadd.f32 0.0, %v740
    %v742 = vpop.f32.mrb[0].mxu0
    %743 = vdwg.mxu0
    %744 = vst.msk [vmem:[#allocation2 + $0x5] sm:$0x1] %vm363, %v741
    %s745 = scalar_lea.vmem %s7, 192
    %v746 = vld [vmem:[%s745] sm:$0xff]
    %v747 = vld [vmem:[%s745 + $0x8] sm:$0xff]
    %v748 = vld [vmem:[%s745 + $0x10] sm:$0xff]
    %v749 = vld [vmem:[%s745 + $0x18] sm:$0xff]
    %750 = vmatprep.subr.mxu0 0.0
    %751 = vmatpush1.msra.mxu0 %v746
    %752 = vmatprep.subr.mxu0 0.0
    %753 = vmatpush1.msra.mxu0 %v747
    %754 = vmatprep.subr.mxu0 0.0
    %755 = vmatpush1.msra.mxu0 %v748
    %756 = vmatprep.subr.mxu0 0.0
    %757 = vmatpush1.msra.mxu0 %v749
    %758 = vmatprep.subr.mxu0 0.0
    %759 = vmatpush1.msra.mxu0 0.0
    %760 = vmatprep.subr.mxu0 0.0
    %761 = vmatpush1.msra.mxu0 0.0
    %762 = vmatprep.subr.mxu0 0.0
    %763 = vmatpush1.msra.mxu0 0.0
    %764 = vmatprep.subr.mxu0 0.0
    %765 = vmatpush1.msra.mxu0 0.0
    %766 = vmatprep.subr.mxu0 0.0
    %767 = vmatpush1.msra.mxu0 0.0
    %768 = vmatprep.subr.mxu0 0.0
    %769 = vmatpush1.msra.mxu0 0.0
    %770 = vmatprep.subr.mxu0 0.0
    %771 = vmatpush1.msra.mxu0 0.0
    %772 = vmatprep.subr.mxu0 0.0
    %773 = vmatpush1.msra.mxu0 0.0
    %774 = vmatprep.subr.mxu0 0.0
    %775 = vmatpush1.msra.mxu0 0.0
    %776 = vmatprep.subr.mxu0 0.0
    %777 = vmatpush1.msra.mxu0 0.0
    %778 = vmatprep.subr.mxu0 0.0
    %779 = vmatpush1.msra.mxu0 0.0
    %780 = vmatprep.subr.mxu0 0.0
    %781 = vmatpush1.msra.mxu0 0.0
    %782 = vmatprep.subr.mxu0 0.0
    %783 = vmatpush1.msra.mxu0 0.0
    %784 = vmatprep.subr.mxu0 0.0
    %785 = vmatpush1.msra.mxu0 0.0
    %786 = vmatprep.subr.mxu0 0.0
    %787 = vmatpush1.msra.mxu0 0.0
    %788 = vmatprep.subr.mxu0 0.0
    %789 = vmatpush1.msra.mxu0 0.0
    %790 = vmatprep.subr.mxu0 0.0
    %791 = vmatpush1.msra.mxu0 0.0
    %792 = vmatprep.subr.mxu0 0.0
    %793 = vmatpush1.msra.mxu0 0.0
    %794 = vmatprep.subr.mxu0 0.0
    %795 = vmatpush1.msra.mxu0 0.0
    %796 = vmatprep.subr.mxu0 0.0
    %797 = vmatpush1.msra.mxu0 0.0
    %798 = vmatprep.subr.mxu0 0.0
    %799 = vmatpush1.msra.mxu0 0.0
    %800 = vmatprep.subr.mxu0 0.0
    %801 = vmatpush1.msra.mxu0 0.0
    %802 = vmatprep.subr.mxu0 0.0
    %803 = vmatpush1.msra.mxu0 0.0
    %804 = vmatprep.subr.mxu0 0.0
    %805 = vmatpush1.msra.mxu0 0.0
    %806 = vmatprep.subr.mxu0 0.0
    %807 = vmatpush1.msra.mxu0 0.0
    %808 = vmatprep.subr.mxu0 0.0
    %809 = vmatpush1.msra.mxu0 0.0
    %810 = vmatprep.subr.mxu0 0.0
    %811 = vmatpush1.msra.mxu0 0.0
    %812 = vmatprep.subr.mxu0 0.0
    %813 = vmatpush1.msra.mxu0 0.0
    %814 = vmatprep.mubr.f32.mxu0 0.0
    %815 = vmatmul.mubr.f32.gmra.mrb[0].mxu0 %v291
    %v816 = vpop.f32.mrb[0].mxu0
    %v817 = vadd.f32 0.0, %v816
    %v818 = vpop.f32.mrb[0].mxu0
    %819 = vdwg.mxu0
    %820 = vst.msk [vmem:[#allocation2 + $0x6] sm:$0x1] %vm363, %v817
    %s821 = scalar_lea.vmem %s7, 224
    %v822 = vld [vmem:[%s821] sm:$0xff]
    %v823 = vld [vmem:[%s821 + $0x8] sm:$0xff]
    %v824 = vld [vmem:[%s821 + $0x10] sm:$0xff]
    %v825 = vld [vmem:[%s821 + $0x18] sm:$0xff]
    %826 = vmatprep.subr.mxu0 0.0
    %827 = vmatpush1.msra.mxu0 %v822
    %828 = vmatprep.subr.mxu0 0.0
    %829 = vmatpush1.msra.mxu0 %v823
    %830 = vmatprep.subr.mxu0 0.0
    %831 = vmatpush1.msra.mxu0 %v824
    %832 = vmatprep.subr.mxu0 0.0
    %833 = vmatpush1.msra.mxu0 %v825
    %834 = vmatprep.subr.mxu0 0.0
    %835 = vmatpush1.msra.mxu0 0.0
    %836 = vmatprep.subr.mxu0 0.0
    %837 = vmatpush1.msra.mxu0 0.0
    %838 = vmatprep.subr.mxu0 0.0
    %839 = vmatpush1.msra.mxu0 0.0
    %840 = vmatprep.subr.mxu0 0.0
    %841 = vmatpush1.msra.mxu0 0.0
    %842 = vmatprep.subr.mxu0 0.0
    %843 = vmatpush1.msra.mxu0 0.0
    %844 = vmatprep.subr.mxu0 0.0
    %845 = vmatpush1.msra.mxu0 0.0
    %846 = vmatprep.subr.mxu0 0.0
    %847 = vmatpush1.msra.mxu0 0.0
    %848 = vmatprep.subr.mxu0 0.0
    %849 = vmatpush1.msra.mxu0 0.0
    %850 = vmatprep.subr.mxu0 0.0
    %851 = vmatpush1.msra.mxu0 0.0
    %852 = vmatprep.subr.mxu0 0.0
    %853 = vmatpush1.msra.mxu0 0.0
    %854 = vmatprep.subr.mxu0 0.0
    %855 = vmatpush1.msra.mxu0 0.0
    %856 = vmatprep.subr.mxu0 0.0
    %857 = vmatpush1.msra.mxu0 0.0
    %858 = vmatprep.subr.mxu0 0.0
    %859 = vmatpush1.msra.mxu0 0.0
    %860 = vmatprep.subr.mxu0 0.0
    %861 = vmatpush1.msra.mxu0 0.0
    %862 = vmatprep.subr.mxu0 0.0
    %863 = vmatpush1.msra.mxu0 0.0
    %864 = vmatprep.subr.mxu0 0.0
    %865 = vmatpush1.msra.mxu0 0.0
    %866 = vmatprep.subr.mxu0 0.0
    %867 = vmatpush1.msra.mxu0 0.0
    %868 = vmatprep.subr.mxu0 0.0
    %869 = vmatpush1.msra.mxu0 0.0
    %870 = vmatprep.subr.mxu0 0.0
    %871 = vmatpush1.msra.mxu0 0.0
    %872 = vmatprep.subr.mxu0 0.0
    %873 = vmatpush1.msra.mxu0 0.0
    %874 = vmatprep.subr.mxu0 0.0
    %875 = vmatpush1.msra.mxu0 0.0
    %876 = vmatprep.subr.mxu0 0.0
    %877 = vmatpush1.msra.mxu0 0.0
    %878 = vmatprep.subr.mxu0 0.0
    %879 = vmatpush1.msra.mxu0 0.0
    %880 = vmatprep.subr.mxu0 0.0
    %881 = vmatpush1.msra.mxu0 0.0
    %882 = vmatprep.subr.mxu0 0.0
    %883 = vmatpush1.msra.mxu0 0.0
    %884 = vmatprep.subr.mxu0 0.0
    %885 = vmatpush1.msra.mxu0 0.0
    %886 = vmatprep.subr.mxu0 0.0
    %887 = vmatpush1.msra.mxu0 0.0
    %888 = vmatprep.subr.mxu0 0.0
    %889 = vmatpush1.msra.mxu0 0.0
    %890 = vmatprep.mubr.f32.mxu0 0.0
    %891 = vmatmul.mubr.f32.gmra.mrb[0].mxu0 %v291
    %v892 = vpop.f32.mrb[0].mxu0
    %v893 = vadd.f32 0.0, %v892
    %v894 = vpop.f32.mrb[0].mxu0
    %895 = vdwg.mxu0
    %896 = vst.msk [vmem:[#allocation2 + $0x7] sm:$0x1] %vm363, %v893
    %v897 = vld [vmem:[#allocation2] sm:$0xff]
    %v898 = vld [vmem:[%s8] sm:$0xff]
    %v899 = vadd.f32 %v897, %v898
    %vm900 = vcmask 64512
    %v901 = vsel %vm900, %v899, -inf
    %902 = vmax.xlane.f32.xlu0 %v901
    %v903 = vpop.xlane.xlu0 %902
    %v904 = vrot.slane %v903, 4
    %v905 = vmax.f32 %v903, %v904
    %v906 = vrot.slane %v905, 2
    %v907 = vmax.f32 %v905, %v906
    %v908 = vrot.slane %v907, 1
    %v909 = vmax.f32 %v907, %v908
    %s910 = vtos %v909
    %v911 = vstv %s910
    %v912 = vsub.f32 %v899, %v911
    %v913 = vmul.f32 %v912, 2.0
    %v914 = vmul.f32 %v913, 1.442695
    %v915 = vpow.pop %v914
    %v916 = vld [vmem:[%s9] sm:$0xff]
    %v917 = vld [vmem:[%s10] sm:$0x1]
    %v918 = vsel %vm900, %v915, 0.0
    %919 = vadd.xlane.f32.xlu0 %v918
    %v920 = vpop.xlane.xlu0 %919
    %v921 = vadd.f32 %v920, 1e-12
    %v922 = vrcp.pop %v921
    %v923 = vmul.f32 %v916, %v922
    %925 = vset.pattern.permute.xlu0 0
    %926 = vperm.xlu0 %925, %v923
    %v927 = vpop.permute.xlu0 %926
    %v929 = vmul.f32 %v915, %v927
    %v930 = vsel %vm900, %v929, 0.0
    %v931 = vrot.slane %v930, 4
    %v932 = vadd.f32 %v930, %v931
    %v933 = vrot.slane %v932, 2
    %v934 = vadd.f32 %v932, %v933
    %v935 = vrot.slane %v934, 1
    %v936 = vadd.f32 %v934, %v935
    %v937 = vadd.f32 %v936, 1e-12
    %v938 = vrcp.pop %v937
    %v939 = vmul.f32 %v917, %v938
    %v941 = vlaneseq
    %v942 = vshrl.u32 %v941, 7
    %v943 = vsub.s32 0, %v942
    %v944 = vrot.slane %v939, %v943
    %v946 = vmul.f32 %v929, %v944
    %v947 = vsel %vm900, %v946, 0.0
    %948 = vadd.xlane.f32.xlu0 %v947
    %v949 = vpop.xlane.xlu0 %948
    %v950 = vadd.f32 %v949, 1e-12
    %v951 = vrcp.pop %v950
    %v952 = vmul.f32 %v916, %v951
    %954 = vset.pattern.permute.xlu0 0
    %955 = vperm.xlu0 %954, %v952
    %v956 = vpop.permute.xlu0 %955
    %v958 = vmul.f32 %v946, %v956
    %v959 = vsel %vm900, %v958, 0.0
    %v960 = vrot.slane %v959, 4
    %v961 = vadd.f32 %v959, %v960
    %v962 = vrot.slane %v961, 2
    %v963 = vadd.f32 %v961, %v962
    %v964 = vrot.slane %v963, 1
    %v965 = vadd.f32 %v963, %v964
    %v966 = vadd.f32 %v965, 1e-12
    %v967 = vrcp.pop %v966
    %v968 = vmul.f32 %v917, %v967
    %v970 = vlaneseq
    %v971 = vshrl.u32 %v970, 7
    %v972 = vsub.s32 0, %v971
    %v973 = vrot.slane %v968, %v972
    %v975 = vmul.f32 %v958, %v973
    %v976 = vsel %vm900, %v975, 0.0
    %977 = vadd.xlane.f32.xlu0 %v976
    %v978 = vpop.xlane.xlu0 %977
    %v979 = vadd.f32 %v978, 1e-12
    %v980 = vrcp.pop %v979
    %v981 = vmul.f32 %v916, %v980
    %983 = vset.pattern.permute.xlu0 0
    %984 = vperm.xlu0 %983, %v981
    %v985 = vpop.permute.xlu0 %984
    %v987 = vmul.f32 %v975, %v985
    %v988 = vsel %vm900, %v987, 0.0
    %v989 = vrot.slane %v988, 4
    %v990 = vadd.f32 %v988, %v989
    %v991 = vrot.slane %v990, 2
    %v992 = vadd.f32 %v990, %v991
    %v993 = vrot.slane %v992, 1
    %v994 = vadd.f32 %v992, %v993
    %v995 = vadd.f32 %v994, 1e-12
    %v996 = vrcp.pop %v995
    %v997 = vmul.f32 %v917, %v996
    %v999 = vlaneseq
    %v1000 = vshrl.u32 %v999, 7
    %v1001 = vsub.s32 0, %v1000
    %v1002 = vrot.slane %v997, %v1001
    %v1004 = vmul.f32 %v987, %v1002
    %v1005 = vsel %vm900, %v1004, 0.0
    %1006 = vadd.xlane.f32.xlu0 %v1005
    %v1007 = vpop.xlane.xlu0 %1006
    %v1008 = vadd.f32 %v1007, 1e-12
    %v1009 = vrcp.pop %v1008
    %v1010 = vmul.f32 %v916, %v1009
    %1012 = vset.pattern.permute.xlu0 0
    %1013 = vperm.xlu0 %1012, %v1010
    %v1014 = vpop.permute.xlu0 %1013
    %v1016 = vmul.f32 %v1004, %v1014
    %v1017 = vsel %vm900, %v1016, 0.0
    %v1018 = vrot.slane %v1017, 4
    %v1019 = vadd.f32 %v1017, %v1018
    %v1020 = vrot.slane %v1019, 2
    %v1021 = vadd.f32 %v1019, %v1020
    %v1022 = vrot.slane %v1021, 1
    %v1023 = vadd.f32 %v1021, %v1022
    %v1024 = vadd.f32 %v1023, 1e-12
    %v1025 = vrcp.pop %v1024
    %v1026 = vmul.f32 %v917, %v1025
    %v1028 = vlaneseq
    %v1029 = vshrl.u32 %v1028, 7
    %v1030 = vsub.s32 0, %v1029
    %v1031 = vrot.slane %v1026, %v1030
    %v1033 = vmul.f32 %v1016, %v1031
    %v1034 = vsel %vm900, %v1033, 0.0
    %1035 = vadd.xlane.f32.xlu0 %v1034
    %v1036 = vpop.xlane.xlu0 %1035
    %v1037 = vadd.f32 %v1036, 1e-12
    %v1038 = vrcp.pop %v1037
    %v1039 = vmul.f32 %v916, %v1038
    %1041 = vset.pattern.permute.xlu0 0
    %1042 = vperm.xlu0 %1041, %v1039
    %v1043 = vpop.permute.xlu0 %1042
    %v1045 = vmul.f32 %v1033, %v1043
    %v1046 = vsel %vm900, %v1045, 0.0
    %v1047 = vrot.slane %v1046, 4
    %v1048 = vadd.f32 %v1046, %v1047
    %v1049 = vrot.slane %v1048, 2
    %v1050 = vadd.f32 %v1048, %v1049
    %v1051 = vrot.slane %v1050, 1
    %v1052 = vadd.f32 %v1050, %v1051
    %v1053 = vadd.f32 %v1052, 1e-12
    %v1054 = vrcp.pop %v1053
    %v1055 = vmul.f32 %v917, %v1054
    %v1057 = vlaneseq
    %v1058 = vshrl.u32 %v1057, 7
    %v1059 = vsub.s32 0, %v1058
    %v1060 = vrot.slane %v1055, %v1059
    %v1062 = vmul.f32 %v1045, %v1060
    %v1063 = vsel %vm900, %v1062, 0.0
    %1064 = vadd.xlane.f32.xlu0 %v1063
    %v1065 = vpop.xlane.xlu0 %1064
    %v1066 = vadd.f32 %v1065, 1e-12
    %v1067 = vrcp.pop %v1066
    %v1068 = vmul.f32 %v916, %v1067
    %1070 = vset.pattern.permute.xlu0 0
    %1071 = vperm.xlu0 %1070, %v1068
    %v1072 = vpop.permute.xlu0 %1071
    %v1074 = vmul.f32 %v1062, %v1072
    %v1075 = vsel %vm900, %v1074, 0.0
    %v1076 = vrot.slane %v1075, 4
    %v1077 = vadd.f32 %v1075, %v1076
    %v1078 = vrot.slane %v1077, 2
    %v1079 = vadd.f32 %v1077, %v1078
    %v1080 = vrot.slane %v1079, 1
    %v1081 = vadd.f32 %v1079, %v1080
    %v1082 = vadd.f32 %v1081, 1e-12
    %v1083 = vrcp.pop %v1082
    %v1084 = vmul.f32 %v917, %v1083
    %v1086 = vlaneseq
    %v1087 = vshrl.u32 %v1086, 7
    %v1088 = vsub.s32 0, %v1087
    %v1089 = vrot.slane %v1084, %v1088
    %v1091 = vmul.f32 %v1074, %v1089
    %v1092 = vsel %vm900, %v1091, 0.0
    %1093 = vadd.xlane.f32.xlu0 %v1092
    %v1094 = vpop.xlane.xlu0 %1093
    %v1095 = vadd.f32 %v1094, 1e-12
    %v1096 = vrcp.pop %v1095
    %v1097 = vmul.f32 %v916, %v1096
    %1099 = vset.pattern.permute.xlu0 0
    %1100 = vperm.xlu0 %1099, %v1097
    %v1101 = vpop.permute.xlu0 %1100
    %v1103 = vmul.f32 %v1091, %v1101
    %v1104 = vsel %vm900, %v1103, 0.0
    %v1105 = vrot.slane %v1104, 4
    %v1106 = vadd.f32 %v1104, %v1105
    %v1107 = vrot.slane %v1106, 2
    %v1108 = vadd.f32 %v1106, %v1107
    %v1109 = vrot.slane %v1108, 1
    %v1110 = vadd.f32 %v1108, %v1109
    %v1111 = vadd.f32 %v1110, 1e-12
    %v1112 = vrcp.pop %v1111
    %v1113 = vmul.f32 %v917, %v1112
    %v1115 = vlaneseq
    %v1116 = vshrl.u32 %v1115, 7
    %v1117 = vsub.s32 0, %v1116
    %v1118 = vrot.slane %v1113, %v1117
    %v1120 = vmul.f32 %v1103, %v1118
    %v1121 = vsel %vm900, %v1120, 0.0
    %1122 = vadd.xlane.f32.xlu0 %v1121
    %v1123 = vpop.xlane.xlu0 %1122
    %v1124 = vadd.f32 %v1123, 1e-12
    %v1125 = vrcp.pop %v1124
    %v1126 = vmul.f32 %v916, %v1125
    %1128 = vset.pattern.permute.xlu0 0
    %1129 = vperm.xlu0 %1128, %v1126
    %v1130 = vpop.permute.xlu0 %1129
    %v1132 = vmul.f32 %v1120, %v1130
    %v1133 = vsel %vm900, %v1132, 0.0
    %v1134 = vrot.slane %v1133, 4
    %v1135 = vadd.f32 %v1133, %v1134
    %v1136 = vrot.slane %v1135, 2
    %v1137 = vadd.f32 %v1135, %v1136
    %v1138 = vrot.slane %v1137, 1
    %v1139 = vadd.f32 %v1137, %v1138
    %v1140 = vadd.f32 %v1139, 1e-12
    %v1141 = vrcp.pop %v1140
    %v1142 = vmul.f32 %v917, %v1141
    %v1144 = vlaneseq
    %v1145 = vshrl.u32 %v1144, 7
    %v1146 = vsub.s32 0, %v1145
    %v1147 = vrot.slane %v1142, %v1146
    %v1149 = vmul.f32 %v1132, %v1147
    %v1150 = vsel %vm900, %v1149, 0.0
    %1151 = vadd.xlane.f32.xlu0 %v1150
    %v1152 = vpop.xlane.xlu0 %1151
    %v1153 = vadd.f32 %v1152, 1e-12
    %v1154 = vrcp.pop %v1153
    %v1155 = vmul.f32 %v916, %v1154
    %1157 = vset.pattern.permute.xlu0 0
    %1158 = vperm.xlu0 %1157, %v1155
    %v1159 = vpop.permute.xlu0 %1158
    %v1161 = vmul.f32 %v1149, %v1159
    %v1162 = vsel %vm900, %v1161, 0.0
    %v1163 = vrot.slane %v1162, 4
    %v1164 = vadd.f32 %v1162, %v1163
    %v1165 = vrot.slane %v1164, 2
    %v1166 = vadd.f32 %v1164, %v1165
    %v1167 = vrot.slane %v1166, 1
    %v1168 = vadd.f32 %v1166, %v1167
    %v1169 = vadd.f32 %v1168, 1e-12
    %v1170 = vrcp.pop %v1169
    %v1171 = vmul.f32 %v917, %v1170
    %v1173 = vlaneseq
    %v1174 = vshrl.u32 %v1173, 7
    %v1175 = vsub.s32 0, %v1174
    %v1176 = vrot.slane %v1171, %v1175
    %v1178 = vmul.f32 %v1161, %v1176
    %v1179 = vsel %vm900, %v1178, 0.0
    %1180 = vadd.xlane.f32.xlu0 %v1179
    %v1181 = vpop.xlane.xlu0 %1180
    %v1182 = vadd.f32 %v1181, 1e-12
    %v1183 = vrcp.pop %v1182
    %v1184 = vmul.f32 %v916, %v1183
    %1186 = vset.pattern.permute.xlu0 0
    %1187 = vperm.xlu0 %1186, %v1184
    %v1188 = vpop.permute.xlu0 %1187
    %v1190 = vmul.f32 %v1178, %v1188
    %v1191 = vsel %vm900, %v1190, 0.0
    %v1192 = vrot.slane %v1191, 4
    %v1193 = vadd.f32 %v1191, %v1192
    %v1194 = vrot.slane %v1193, 2
    %v1195 = vadd.f32 %v1193, %v1194
    %v1196 = vrot.slane %v1195, 1
    %v1197 = vadd.f32 %v1195, %v1196
    %v1198 = vadd.f32 %v1197, 1e-12
    %v1199 = vrcp.pop %v1198
    %v1200 = vmul.f32 %v917, %v1199
    %v1202 = vlaneseq
    %v1203 = vshrl.u32 %v1202, 7
    %v1204 = vsub.s32 0, %v1203
    %v1205 = vrot.slane %v1200, %v1204
    %v1207 = vmul.f32 %v1190, %v1205
    %1208 = vst.msk [vmem:[#allocation3] sm:$0xff] %vm900, %v1207
    // Predicated region
    $region46: #{tpu_custom_call.1} parent=1 // pred_check
      _
    $region47: #{tpu_custom_call.1} parent=1 // pred_check_branch
      %1210 = sbr.rel (0) target = $region49
    $region48: #{tpu_custom_call.1} parent=1 // pred_region
      %s1212 = ssub.s32 128, 128
      %1213 = vsyncadd [#allocation4], %s1212
      %s1215 = sshll.u32 [#allocation3], 4
      %s1216 = int_to_ptr.vmem [resolvable:$true] %s1215
      %1218 = dma.vmem_to_hbm [thread:$0]  %s1216, 128, %s11, [#allocation4]
    $region49: #{tpu_custom_call.1} parent=1 // pred_fallthru
      _
    // Predicated region
    $region50: #{tpu_custom_call.1} parent=1 // pred_check
      _
    $region51: #{tpu_custom_call.1} parent=1 // pred_check_branch
      %1220 = sbr.rel (0) target = $region53
    $region52: #{tpu_custom_call.1} parent=1 // pred_region
      %1221 = dma.done [#allocation4], 128
    $region53: #{tpu_custom_call.1} parent=1 // pred_fallthru
      _
    %1222 = vsyncpa [#allocation4], 1

</llo_original>
